<compile_context>
chip_gen: v6e
topology: v6e:2x2x1
jax: 0.10.0
libtpu: 0.0.40
codegen_flags: <defaults>
</compile_context>

<pallas_src>
import functools

import jax
import jax.numpy as jnp
from jax.experimental import pallas as pl
from jax.experimental.pallas import tpu as pltpu


# ---------------------------------------------------------------------------
# helpers
# ---------------------------------------------------------------------------
def _round_up(x, m):
    return ((x + m - 1) // m) * m


def _choose_tile(n, max_tile=256):
    """N-tile size: full array if small, else a 128-multiple tile + padded N."""
    if n <= max_tile:
        return n, n
    return max_tile, _round_up(n, max_tile)


def _cparams(dimension_semantics):
    """Per-generation VMEM budget: ~3/4 of physical VMEM, capped at 100 MiB."""
    try:
        cap = getattr(pltpu.get_tpu_info(), "vmem_capacity_bytes",
                      64 * 1024 * 1024)
    except Exception:
        cap = 64 * 1024 * 1024
    limit = min(int(cap) * 3 // 4, 100 * 1024 * 1024)
    return pltpu.CompilerParams(dimension_semantics=dimension_semantics,
                                vmem_limit_bytes=limit)


# ---------------------------------------------------------------------------
# Kernel 1: 3-NN inverse-distance-weighted interpolation (channel-first).
# ---------------------------------------------------------------------------
def _interp_kernel(xyz1_ref, xyz2_ref, pts2_ref, out_ref):
    x1 = xyz1_ref[0]                      # [3, TN]   lane = N
    x2 = xyz2_ref[0]                      # [3, S]    lane = S
    p2 = pts2_ref[0]                      # [D2, S]

    x2t = jnp.transpose(x2)               # [S, 3]  (tiny XLU transpose, once/tile)
    s_sz = x2t.shape[0]
    tn = x1.shape[1]

    # |x1|^2 per dense point from sublane slices (pure VPU, no reductions)
    x1sq = (x1[0:1, :] * x1[0:1, :] +
            x1[1:2, :] * x1[1:2, :] +
            x1[2:3, :] * x1[2:3, :])                        # [1, TN]
    x2sq = jnp.sum(x2t * x2t, axis=1, keepdims=True)        # [S, 1]
    # cross term via 3 broadcast FMAs (avoids a lane-padded K=3 MXU matmul)
    cross = (x2t[:, 0:1] * x1[0:1, :] +
             x2t[:, 1:2] * x1[1:2, :] +
             x2t[:, 2:3] * x1[2:3, :])                      # [S, TN]
    # clamp for numerical sanity (cancellation can give tiny negatives)
    d = jnp.maximum(x2sq + x1sq - 2.0 * cross, 0.0)         # [S, TN]

    row = jax.lax.broadcasted_iota(jnp.int32, (s_sz, tn), 0)
    big = jnp.float32(1e30)
    d_work = d
    wmat = jnp.zeros((s_sz, tn), jnp.float32)
    norm = jnp.zeros((1, tn), jnp.float32)
    # 3 nearest neighbours; reductions run along the sublane (S) axis.
    # TODO(synk): the value+index min pair could be fused into one packed-key
    # reduction to further cut XLU work.
    for _ in range(3):
        m = jnp.min(d_work, axis=0, keepdims=True)                      # [1, TN]
        idx = jnp.min(jnp.where(d_work == m, row, s_sz), axis=0,
                      keepdims=True)                                    # [1, TN]
        onehot = (row == idx).astype(jnp.float32)                       # [S, TN]
        w = 1.0 / (m + 1e-8)
        wmat = wmat + onehot * w
        norm = norm + w
        d_work = jnp.where(onehot > 0.0, big, d_work)

    weight = wmat / norm                                                # [S, TN]
    # feature gather as one MXU matmul; output lane dim = TN (lane-dense store)
    out_ref[0] = jnp.dot(p2, weight, preferred_element_type=jnp.float32)


def three_nn_interpolate(xyz1, xyz2, points2, *, tile_n):
    """xyz1 [B,3,Np], xyz2 [B,3,S], points2 [B,D2,S] -> [B,D2,Np] (channel-first)."""
    B, C, Np = xyz1.shape
    S = xyz2.shape[2]
    D2 = points2.shape[1]
    n_tiles = Np // tile_n
    return pl.pallas_call(
        _interp_kernel,
        out_shape=jax.ShapeDtypeStruct((B, D2, Np), jnp.float32),
        grid=(B, n_tiles),
        in_specs=[
            pl.BlockSpec((1, C, tile_n), lambda b, t: (b, 0, t)),
            pl.BlockSpec((1, C, S), lambda b, t: (b, 0, 0)),    # resident over t
            pl.BlockSpec((1, D2, S), lambda b, t: (b, 0, 0)),   # resident over t
        ],
        out_specs=pl.BlockSpec((1, D2, tile_n), lambda b, t: (b, 0, t)),
        compiler_params=_cparams(("parallel", "parallel")),
    )(xyz1, xyz2, points2)


# ---------------------------------------------------------------------------
# Kernel 2: 1x1 conv (bf16 MXU matmul) + resident per-channel sum / sumsq
# accumulator (exact full-batch BatchNorm statistics), tiled over (B, N-tiles).
# ---------------------------------------------------------------------------
def _conv_stats_kernel(x_ref, w_ref, b_ref, y_ref, stats_ref, *, n_valid):
    t = pl.program_id(1)

    @pl.when(jnp.logical_and(pl.program_id(0) == 0, t == 0))
    def _init():
        stats_ref[...] = jnp.zeros_like(stats_ref)

    x = x_ref[0]                                                      # [Cin, TN]
    y = jnp.dot(w_ref[...].astype(jnp.bfloat16), x.astype(jnp.bfloat16),
                preferred_element_type=jnp.float32) + b_ref[...]      # [Cout, TN]
    y_ref[0] = y

    tn = y.shape[1]
    col = jax.lax.broadcasted_iota(jnp.int32, (1, tn), 1) + t * tn
    mask = (col < n_valid).astype(jnp.float32)                        # drop N-padding
    ym = y * mask
    stats_ref[:, 0:1] += jnp.sum(ym, axis=1, keepdims=True)
    stats_ref[:, 1:2] += jnp.sum(ym * ym, axis=1, keepdims=True)


def _conv_pair_stats_kernel(x1_ref, x2_ref, w1_ref, w2_ref, b_ref,
                            y_ref, stats_ref, *, n_valid):
    # First MLP layer: fuses [points1 ; interpolated] without materializing
    # the channel concat in HBM (split weight, two small-K MXU dots).
    t = pl.program_id(1)

    @pl.when(jnp.logical_and(pl.program_id(0) == 0, t == 0))
    def _init():
        stats_ref[...] = jnp.zeros_like(stats_ref)

    x1 = x1_ref[0].astype(jnp.bfloat16)                               # [D1, TN]
    x2 = x2_ref[0].astype(jnp.bfloat16)                               # [D2, TN]
    y = (jnp.dot(w1_ref[...].astype(jnp.bfloat16), x1,
                 preferred_element_type=jnp.float32) +
         jnp.dot(w2_ref[...].astype(jnp.bfloat16), x2,
                 preferred_element_type=jnp.float32) + b_ref[...])    # [Cout, TN]
    y_ref[0] = y

    tn = y.shape[1]
    col = jax.lax.broadcasted_iota(jnp.int32, (1, tn), 1) + t * tn
    mask = (col < n_valid).astype(jnp.float32)
    ym = y * mask
    stats_ref[:, 0:1] += jnp.sum(ym, axis=1, keepdims=True)
    stats_ref[:, 1:2] += jnp.sum(ym * ym, axis=1, keepdims=True)


def conv_stats(x, w, b, *, tile_n, n_valid):
    """x [B,Cin,Np], w [Cout,Cin] -> (y [B,Cout,Np], stats [Cout,2])."""
    B, Cin, Np = x.shape
    Cout = w.shape[0]
    n_tiles = Np // tile_n
    kern = functools.partial(_conv_stats_kernel, n_valid=n_valid)
    return pl.pallas_call(
        kern,
        out_shape=(jax.ShapeDtypeStruct((B, Cout, Np), jnp.float32),
                   jax.ShapeDtypeStruct((Cout, 2), jnp.float32)),
        grid=(B, n_tiles),
        in_specs=[
            pl.BlockSpec((1, Cin, tile_n), lambda bb, t: (bb, 0, t)),
            pl.BlockSpec((Cout, Cin), lambda bb, t: (0, 0)),
            pl.BlockSpec((Cout, 1), lambda bb, t: (0, 0)),
        ],
        out_specs=(
            pl.BlockSpec((1, Cout, tile_n), lambda bb, t: (bb, 0, t)),
            pl.BlockSpec((Cout, 2), lambda bb, t: (0, 0)),   # resident accumulator
        ),
        compiler_params=_cparams(("arbitrary", "arbitrary")),
    )(x, w, b.reshape(Cout, 1))


def conv_pair_stats(x1, x2, w1, w2, b, *, tile_n, n_valid):
    B, D1, Np = x1.shape
    D2 = x2.shape[1]
    Cout = w1.shape[0]
    n_tiles = Np // tile_n
    kern = functools.partial(_conv_pair_stats_kernel, n_valid=n_valid)
    return pl.pallas_call(
        kern,
        out_shape=(jax.ShapeDtypeStruct((B, Cout, Np), jnp.float32),
                   jax.ShapeDtypeStruct((Cout, 2), jnp.float32)),
        grid=(B, n_tiles),
        in_specs=[
            pl.BlockSpec((1, D1, tile_n), lambda bb, t: (bb, 0, t)),
            pl.BlockSpec((1, D2, tile_n), lambda bb, t: (bb, 0, t)),
            pl.BlockSpec((Cout, D1), lambda bb, t: (0, 0)),
            pl.BlockSpec((Cout, D2), lambda bb, t: (0, 0)),
            pl.BlockSpec((Cout, 1), lambda bb, t: (0, 0)),
        ],
        out_specs=(
            pl.BlockSpec((1, Cout, tile_n), lambda bb, t: (bb, 0, t)),
            pl.BlockSpec((Cout, 2), lambda bb, t: (0, 0)),
        ),
        compiler_params=_cparams(("arbitrary", "arbitrary")),
    )(x1, x2, w1, w2, b.reshape(Cout, 1))


# ---------------------------------------------------------------------------
# Kernel 3: BatchNorm (pre-folded scale/shift) + ReLU, trivially tiled.
# ---------------------------------------------------------------------------
def _bn_relu_kernel(y_ref, scale_ref, shift_ref, o_ref):
    o_ref[0] = jnp.maximum(y_ref[0] * scale_ref[...] + shift_ref[...], 0.0)


def bn_relu(y, scale, shift, *, tile_n):
    B, Cout, Np = y.shape
    n_tiles = Np // tile_n
    return pl.pallas_call(
        _bn_relu_kernel,
        out_shape=jax.ShapeDtypeStruct((B, Cout, Np), jnp.float32),
        grid=(B, n_tiles),
        in_specs=[
            pl.BlockSpec((1, Cout, tile_n), lambda bb, t: (bb, 0, t)),
            pl.BlockSpec((Cout, 1), lambda bb, t: (0, 0)),
            pl.BlockSpec((Cout, 1), lambda bb, t: (0, 0)),
        ],
        out_specs=pl.BlockSpec((1, Cout, tile_n), lambda bb, t: (bb, 0, t)),
        compiler_params=_cparams(("parallel", "parallel")),
    )(y, scale.reshape(Cout, 1), shift.reshape(Cout, 1))


# ---------------------------------------------------------------------------
# FP forward (JAX glue).
# ---------------------------------------------------------------------------
def fp_forward(params, xyz1, xyz2, points1, points2, *, eps=1e-5):
    """
    xyz1 [B,3,N], xyz2 [B,3,S], points1 [B,D1,N] or None, points2 [B,D2,S]
    -> [B, mlp[-1], N].  BatchNorm uses training-mode batch statistics
    (PyTorch default for a freshly constructed module).
    """
    B, _, N = xyz1.shape
    S = xyz2.shape[2]
    D2 = points2.shape[1]
    tile_n, n_pad = _choose_tile(N)
    pad = n_pad - N

    def pad_n(a):
        return jnp.pad(a, ((0, 0), (0, 0), (0, pad))) if pad else a

    if S == 1:
        interp = jnp.broadcast_to(points2, (B, D2, n_pad)).astype(jnp.float32)
    else:
        interp = three_nn_interpolate(pad_n(xyz1), xyz2, points2, tile_n=tile_n)

    count = float(B * N)
    x = None
    for li, (w, b, gamma, beta) in enumerate(params):
        if li == 0:
            if points1 is not None:
                D1 = points1.shape[1]
                y, stats = conv_pair_stats(pad_n(points1), interp,
                                           w[:, :D1], w[:, D1:], b,
                                           tile_n=tile_n, n_valid=N)
            else:
                y, stats = conv_stats(interp, w, b, tile_n=tile_n, n_valid=N)
        else:
            y, stats = conv_stats(x, w, b, tile_n=tile_n, n_valid=N)
        mean = stats[:, 0] / count
        var = jnp.maximum(stats[:, 1] / count - mean * mean, 0.0)  # biased var
        scale = gamma * jax.lax.rsqrt(var + eps)
        shift = beta - mean * scale
        x = bn_relu(y, scale, shift, tile_n=tile_n)
    return x[:, :, :N]


def init_fp_params(key, in_channel, mlp):
    """Conv1d weight [Cout, Cin, 1] stored as [Cout, Cin]; BN gamma=1, beta=0."""
    params = []
    last = in_channel
    for out_ch in mlp:
        key, k1, k2 = jax.random.split(key, 3)
        bound = 1.0 / (last ** 0.5)
        w = jax.random.uniform(k1, (out_ch, last), jnp.float32, -bound, bound)
        b = jax.random.uniform(k2, (out_ch,), jnp.float32, -bound, bound)
        params.append((w, b, jnp.ones((out_ch,), jnp.float32),
                       jnp.zeros((out_ch,), jnp.float32)))
        last = out_ch
    return params


# ---------------------------------------------------------------------------
# Pure-JAX f32 reference (mirrors the PyTorch module) for a sanity check.
# ---------------------------------------------------------------------------
def fp_reference(params, xyz1, xyz2, points1, points2, eps=1e-5):
    x1 = jnp.transpose(xyz1, (0, 2, 1))
    x2 = jnp.transpose(xyz2, (0, 2, 1))
    p2 = jnp.transpose(points2, (0, 2, 1))
    B, N, _ = x1.shape
    S = x2.shape[1]
    if S == 1:
        interp = jnp.tile(p2, (1, N, 1))
    else:
        d = (jnp.sum(x1 * x1, -1)[:, :, None] + jnp.sum(x2 * x2, -1)[:, None, :]
             - 2.0 * jnp.einsum("bnc,bsc->bns", x1, x2))
        neg_d, idx = jax.lax.top_k(-d, 3)
        recip = 1.0 / (-neg_d + 1e-8)
        wgt = recip / jnp.sum(recip, -1, keepdims=True)
        onehot = jax.nn.one_hot(idx, S, dtype=p2.dtype)               # [B,N,3,S]
        gathered = jnp.einsum("bnks,bsd->bnkd", onehot, p2)
        interp = jnp.sum(gathered * wgt[..., None], axis=2)
    if points1 is not None:
        feats = jnp.concatenate([jnp.transpose(points1, (0, 2, 1)), interp], -1)
    else:
        feats = interp
    x = feats.reshape(B * N, -1)
    for (w, b, gamma, beta) in params:
        y = x @ w.T + b
        mean = jnp.mean(y, axis=0)
        var = jnp.mean((y - mean) ** 2, axis=0)
        y = (y - mean) / jnp.sqrt(var + eps) * gamma + beta
        x = jnp.maximum(y, 0.0)
    return jnp.transpose(x.reshape(B, N, -1), (0, 2, 1))


if __name__ == "__main__":
    key = jax.random.PRNGKey(0)

    B, N, S = 2, 16, 8
    D1, D2 = 6, 10
    in_channel = D1 + D2          # concat([points1, interpolated]) channels
    mlp = [32, 16]

    k1, k2, k3, k4, kp = jax.random.split(key, 5)
    xyz1 = jax.random.normal(k1, (B, 3, N), jnp.float32)
    xyz2 = jax.random.normal(k2, (B, 3, S), jnp.float32)
    points1 = jax.random.normal(k3, (B, D1, N), jnp.float32)
    points2 = jax.random.normal(k4, (B, D2, S), jnp.float32)

    params = init_fp_params(kp, in_channel, mlp)

    out = jax.jit(fp_forward)(params, xyz1, xyz2, points1, points2)
    out = jax.block_until_ready(out)
    assert out.shape == (B, mlp[-1], N)

    ref = fp_reference(params, xyz1, xyz2, points1, points2)
    assert float(jnp.max(jnp.abs(out - ref))) < 5e-2  # bf16-matmul tolerance

    print("KERNEL_OK")
</pallas_src>

<mosaic_0001>
module attributes {stable_mosaic.version = 11 : i64} {
  func.func @_interp_kernel(%arg0: i32, %arg1: i32, %arg2: memref<1x3x16xf32, #tpu.memory_space<vmem>>, %arg3: memref<1x3x8xf32, #tpu.memory_space<vmem>>, %arg4: memref<1x10x8xf32, #tpu.memory_space<vmem>>, %arg5: memref<1x10x16xf32, #tpu.memory_space<vmem>>) attributes {dimension_semantics = [#tpu.dimension_semantics<parallel>, #tpu.dimension_semantics<parallel>], iteration_bounds = array<i64: 2, 1>, scalar_prefetch = 0 : i64, scratch_operands = 0 : i64, tpu.core_type = #tpu.core_type<tc>, window_params = [{transform_indices = @transform_0, window_bounds = array<i64: 1, 3, 16>}, {transform_indices = @transform_1, window_bounds = array<i64: 1, 3, 8>}, {transform_indices = @transform_2, window_bounds = array<i64: 1, 10, 8>}, {transform_indices = @transform_3, window_bounds = array<i64: 1, 10, 16>}]} {
    %c0 = arith.constant 0 : index
    %c0_0 = arith.constant 0 : index
    %c0_1 = arith.constant 0 : index
    %0 = vector.load %arg2[%c0, %c0_0, %c0_1] : memref<1x3x16xf32, #tpu.memory_space<vmem>>, vector<1x3x16xf32>
    %1 = vector.shape_cast %0 : vector<1x3x16xf32> to vector<3x16xf32>
    %c0_2 = arith.constant 0 : index
    %c0_3 = arith.constant 0 : index
    %c0_4 = arith.constant 0 : index
    %2 = vector.load %arg3[%c0_2, %c0_3, %c0_4] : memref<1x3x8xf32, #tpu.memory_space<vmem>>, vector<1x3x8xf32>
    %3 = vector.shape_cast %2 : vector<1x3x8xf32> to vector<3x8xf32>
    %c0_5 = arith.constant 0 : index
    %c0_6 = arith.constant 0 : index
    %c0_7 = arith.constant 0 : index
    %4 = vector.load %arg4[%c0_5, %c0_6, %c0_7] : memref<1x10x8xf32, #tpu.memory_space<vmem>>, vector<1x10x8xf32>
    %5 = vector.shape_cast %4 : vector<1x10x8xf32> to vector<10x8xf32>
    %6 = tpu.transpose %3, [1, 0] : vector<3x8xf32> -> vector<8x3xf32>
    %7 = vector.extract_strided_slice %1 {offsets = [0, 0], sizes = [1, 16], strides = [1, 1]} : vector<3x16xf32> to vector<1x16xf32>
    %8 = vector.extract_strided_slice %1 {offsets = [0, 0], sizes = [1, 16], strides = [1, 1]} : vector<3x16xf32> to vector<1x16xf32>
    %9 = arith.mulf %7, %8 : vector<1x16xf32>
    %10 = vector.extract_strided_slice %1 {offsets = [1, 0], sizes = [1, 16], strides = [1, 1]} : vector<3x16xf32> to vector<1x16xf32>
    %11 = vector.extract_strided_slice %1 {offsets = [1, 0], sizes = [1, 16], strides = [1, 1]} : vector<3x16xf32> to vector<1x16xf32>
    %12 = arith.mulf %10, %11 : vector<1x16xf32>
    %13 = arith.addf %9, %12 : vector<1x16xf32>
    %14 = vector.extract_strided_slice %1 {offsets = [2, 0], sizes = [1, 16], strides = [1, 1]} : vector<3x16xf32> to vector<1x16xf32>
    %15 = vector.extract_strided_slice %1 {offsets = [2, 0], sizes = [1, 16], strides = [1, 1]} : vector<3x16xf32> to vector<1x16xf32>
    %16 = arith.mulf %14, %15 : vector<1x16xf32>
    %17 = arith.addf %13, %16 : vector<1x16xf32>
    %18 = arith.mulf %6, %6 : vector<8x3xf32>
    %cst = arith.constant dense<0.000000e+00> : vector<8xf32>
    %19 = vector.multi_reduction <add>, %18, %cst [1] : vector<8x3xf32> to vector<8xf32>
    %20 = vector.shape_cast %19 : vector<8xf32> to vector<8x1xf32>
    %21 = vector.extract_strided_slice %6 {offsets = [0, 0], sizes = [8, 1], strides = [1, 1]} : vector<8x3xf32> to vector<8x1xf32>
    %22 = vector.extract_strided_slice %1 {offsets = [0, 0], sizes = [1, 16], strides = [1, 1]} : vector<3x16xf32> to vector<1x16xf32>
    %23 = vector.broadcast %21 : vector<8x1xf32> to vector<8x16xf32>
    %24 = vector.broadcast %22 : vector<1x16xf32> to vector<8x16xf32>
    %25 = arith.mulf %23, %24 : vector<8x16xf32>
    %26 = vector.extract_strided_slice %6 {offsets = [0, 1], sizes = [8, 1], strides = [1, 1]} : vector<8x3xf32> to vector<8x1xf32>
    %27 = vector.extract_strided_slice %1 {offsets = [1, 0], sizes = [1, 16], strides = [1, 1]} : vector<3x16xf32> to vector<1x16xf32>
    %28 = vector.broadcast %26 : vector<8x1xf32> to vector<8x16xf32>
    %29 = vector.broadcast %27 : vector<1x16xf32> to vector<8x16xf32>
    %30 = arith.mulf %28, %29 : vector<8x16xf32>
    %31 = arith.addf %25, %30 : vector<8x16xf32>
    %32 = vector.extract_strided_slice %6 {offsets = [0, 2], sizes = [8, 1], strides = [1, 1]} : vector<8x3xf32> to vector<8x1xf32>
    %33 = vector.extract_strided_slice %1 {offsets = [2, 0], sizes = [1, 16], strides = [1, 1]} : vector<3x16xf32> to vector<1x16xf32>
    %34 = vector.broadcast %32 : vector<8x1xf32> to vector<8x16xf32>
    %35 = vector.broadcast %33 : vector<1x16xf32> to vector<8x16xf32>
    %36 = arith.mulf %34, %35 : vector<8x16xf32>
    %37 = arith.addf %31, %36 : vector<8x16xf32>
    %38 = vector.broadcast %20 : vector<8x1xf32> to vector<8x16xf32>
    %39 = vector.broadcast %17 : vector<1x16xf32> to vector<8x16xf32>
    %40 = arith.addf %38, %39 : vector<8x16xf32>
    %cst_8 = arith.constant 2.000000e+00 : f32
    %41 = vector.broadcast %cst_8 : f32 to vector<8x16xf32>
    %42 = arith.mulf %41, %37 : vector<8x16xf32>
    %43 = arith.subf %40, %42 : vector<8x16xf32>
    %cst_9 = arith.constant 0.000000e+00 : f32
    %44 = vector.broadcast %cst_9 : f32 to vector<8x16xf32>
    %45 = arith.maximumf %43, %44 : vector<8x16xf32>
    %46 = tpu.iota {dimensions = array<i32: 0>} : vector<8x16xi32>
    %cst_10 = arith.constant 0.000000e+00 : f32
    %47 = vector.broadcast %cst_10 : f32 to vector<8x16xf32>
    %cst_11 = arith.constant 0.000000e+00 : f32
    %48 = vector.broadcast %cst_11 : f32 to vector<1x16xf32>
    %cst_12 = arith.constant dense<0x7F800000> : vector<16xf32>
    %49 = vector.multi_reduction <minimumf>, %45, %cst_12 [0] : vector<8x16xf32> to vector<16xf32>
    %50 = vector.shape_cast %49 : vector<16xf32> to vector<1x16xf32>
    %51 = vector.broadcast %50 : vector<1x16xf32> to vector<8x16xf32>
    %52 = arith.cmpf oeq, %45, %51 : vector<8x16xf32>
    %c8_i32 = arith.constant 8 : i32
    %53 = vector.broadcast %c8_i32 : i32 to vector<8x16xi32>
    %54 = arith.select %52, %46, %53 : vector<8x16xi1>, vector<8x16xi32>
    %cst_13 = arith.constant dense<2147483647> : vector<16xi32>
    %55 = vector.multi_reduction <minsi>, %54, %cst_13 [0] : vector<8x16xi32> to vector<16xi32>
    %56 = vector.shape_cast %55 : vector<16xi32> to vector<1x16xi32>
    %57 = vector.broadcast %56 : vector<1x16xi32> to vector<8x16xi32>
    %58 = arith.cmpi eq, %46, %57 : vector<8x16xi32>
    %59 = arith.extui %58 : vector<8x16xi1> to vector<8x16xi32>
    %60 = arith.sitofp %59 : vector<8x16xi32> to vector<8x16xf32>
    %cst_14 = arith.constant 9.99999993E-9 : f32
    %61 = vector.broadcast %cst_14 : f32 to vector<1x16xf32>
    %62 = arith.addf %50, %61 : vector<1x16xf32>
    %cst_15 = arith.constant 1.000000e+00 : f32
    %63 = vector.broadcast %cst_15 : f32 to vector<1x16xf32>
    %64 = arith.divf %63, %62 : vector<1x16xf32>
    %65 = vector.broadcast %64 : vector<1x16xf32> to vector<8x16xf32>
    %66 = arith.mulf %60, %65 : vector<8x16xf32>
    %67 = arith.addf %47, %66 : vector<8x16xf32>
    %68 = arith.addf %48, %64 : vector<1x16xf32>
    %cst_16 = arith.constant 0.000000e+00 : f32
    %69 = vector.broadcast %cst_16 : f32 to vector<8x16xf32>
    %70 = arith.cmpf ogt, %60, %69 : vector<8x16xf32>
    %cst_17 = arith.constant 1.000000e+30 : f32
    %71 = vector.broadcast %cst_17 : f32 to vector<8x16xf32>
    %72 = arith.select %70, %71, %45 : vector<8x16xi1>, vector<8x16xf32>
    %cst_18 = arith.constant dense<0x7F800000> : vector<16xf32>
    %73 = vector.multi_reduction <minimumf>, %72, %cst_18 [0] : vector<8x16xf32> to vector<16xf32>
    %74 = vector.shape_cast %73 : vector<16xf32> to vector<1x16xf32>
    %75 = vector.broadcast %74 : vector<1x16xf32> to vector<8x16xf32>
    %76 = arith.cmpf oeq, %72, %75 : vector<8x16xf32>
    %c8_i32_19 = arith.constant 8 : i32
    %77 = vector.broadcast %c8_i32_19 : i32 to vector<8x16xi32>
    %78 = arith.select %76, %46, %77 : vector<8x16xi1>, vector<8x16xi32>
    %cst_20 = arith.constant dense<2147483647> : vector<16xi32>
    %79 = vector.multi_reduction <minsi>, %78, %cst_20 [0] : vector<8x16xi32> to vector<16xi32>
    %80 = vector.shape_cast %79 : vector<16xi32> to vector<1x16xi32>
    %81 = vector.broadcast %80 : vector<1x16xi32> to vector<8x16xi32>
    %82 = arith.cmpi eq, %46, %81 : vector<8x16xi32>
    %83 = arith.extui %82 : vector<8x16xi1> to vector<8x16xi32>
    %84 = arith.sitofp %83 : vector<8x16xi32> to vector<8x16xf32>
    %cst_21 = arith.constant 9.99999993E-9 : f32
    %85 = vector.broadcast %cst_21 : f32 to vector<1x16xf32>
    %86 = arith.addf %74, %85 : vector<1x16xf32>
    %cst_22 = arith.constant 1.000000e+00 : f32
    %87 = vector.broadcast %cst_22 : f32 to vector<1x16xf32>
    %88 = arith.divf %87, %86 : vector<1x16xf32>
    %89 = vector.broadcast %88 : vector<1x16xf32> to vector<8x16xf32>
    %90 = arith.mulf %84, %89 : vector<8x16xf32>
    %91 = arith.addf %67, %90 : vector<8x16xf32>
    %92 = arith.addf %68, %88 : vector<1x16xf32>
    %cst_23 = arith.constant 0.000000e+00 : f32
    %93 = vector.broadcast %cst_23 : f32 to vector<8x16xf32>
    %94 = arith.cmpf ogt, %84, %93 : vector<8x16xf32>
    %cst_24 = arith.constant 1.000000e+30 : f32
    %95 = vector.broadcast %cst_24 : f32 to vector<8x16xf32>
    %96 = arith.select %94, %95, %72 : vector<8x16xi1>, vector<8x16xf32>
    %cst_25 = arith.constant dense<0x7F800000> : vector<16xf32>
    %97 = vector.multi_reduction <minimumf>, %96, %cst_25 [0] : vector<8x16xf32> to vector<16xf32>
    %98 = vector.shape_cast %97 : vector<16xf32> to vector<1x16xf32>
    %99 = vector.broadcast %98 : vector<1x16xf32> to vector<8x16xf32>
    %100 = arith.cmpf oeq, %96, %99 : vector<8x16xf32>
    %c8_i32_26 = arith.constant 8 : i32
    %101 = vector.broadcast %c8_i32_26 : i32 to vector<8x16xi32>
    %102 = arith.select %100, %46, %101 : vector<8x16xi1>, vector<8x16xi32>
    %cst_27 = arith.constant dense<2147483647> : vector<16xi32>
    %103 = vector.multi_reduction <minsi>, %102, %cst_27 [0] : vector<8x16xi32> to vector<16xi32>
    %104 = vector.shape_cast %103 : vector<16xi32> to vector<1x16xi32>
    %105 = vector.broadcast %104 : vector<1x16xi32> to vector<8x16xi32>
    %106 = arith.cmpi eq, %46, %105 : vector<8x16xi32>
    %107 = arith.extui %106 : vector<8x16xi1> to vector<8x16xi32>
    %108 = arith.sitofp %107 : vector<8x16xi32> to vector<8x16xf32>
    %cst_28 = arith.constant 9.99999993E-9 : f32
    %109 = vector.broadcast %cst_28 : f32 to vector<1x16xf32>
    %110 = arith.addf %98, %109 : vector<1x16xf32>
    %cst_29 = arith.constant 1.000000e+00 : f32
    %111 = vector.broadcast %cst_29 : f32 to vector<1x16xf32>
    %112 = arith.divf %111, %110 : vector<1x16xf32>
    %113 = vector.broadcast %112 : vector<1x16xf32> to vector<8x16xf32>
    %114 = arith.mulf %108, %113 : vector<8x16xf32>
    %115 = arith.addf %91, %114 : vector<8x16xf32>
    %116 = arith.addf %92, %112 : vector<1x16xf32>
    %117 = vector.broadcast %116 : vector<1x16xf32> to vector<8x16xf32>
    %118 = arith.divf %115, %117 : vector<8x16xf32>
    %cst_30 = arith.constant dense<0.000000e+00> : vector<10x16xf32>
    %119 = tpu.matmul %5, %118, %cst_30 {dimension_numbers = #tpu.dot_dimension_numbers<[1], [0], [0], [1], [0, 0, 1, 1], [], []>} : vector<10x8xf32>, vector<8x16xf32>, vector<10x16xf32> -> vector<10x16xf32>
    %c0_31 = arith.constant 0 : index
    %c0_32 = arith.constant 0 : index
    %c0_33 = arith.constant 0 : index
    %120 = vector.load %arg5[%c0_31, %c0_32, %c0_33] : memref<1x10x16xf32, #tpu.memory_space<vmem>>, vector<1x10x16xf32>
    %121 = vector.shape_cast %120 : vector<1x10x16xf32> to vector<10x16xf32>
    %122 = vector.shape_cast %119 : vector<10x16xf32> to vector<1x10x16xf32>
    tpu.vector_store %arg5[%c0_31, %c0_32, %c0_33], %122 {strides = array<i32>} : memref<1x10x16xf32, #tpu.memory_space<vmem>>, vector<1x10x16xf32>,
    return
  }
  func.func @transform_0(%arg0: i32, %arg1: i32) -> (i32, i32, i32) {
    %c0_i32 = arith.constant 0 : i32
    %c0_i32_0 = arith.constant 0 : i32
    return %arg0, %c0_i32, %arg1 : i32, i32, i32
  }
  func.func @transform_1(%arg0: i32, %arg1: i32) -> (i32, i32, i32) {
    %c0_i32 = arith.constant 0 : i32
    %c0_i32_0 = arith.constant 0 : i32
    %c0_i32_1 = arith.constant 0 : i32
    return %arg0, %c0_i32, %c0_i32_0 : i32, i32, i32
  }
  func.func @transform_2(%arg0: i32, %arg1: i32) -> (i32, i32, i32) {
    %c0_i32 = arith.constant 0 : i32
    %c0_i32_0 = arith.constant 0 : i32
    %c0_i32_1 = arith.constant 0 : i32
    return %arg0, %c0_i32, %c0_i32_0 : i32, i32, i32
  }
  func.func @transform_3(%arg0: i32, %arg1: i32) -> (i32, i32, i32) {
    %c0_i32 = arith.constant 0 : i32
    %c0_i32_0 = arith.constant 0 : i32
    return %arg0, %c0_i32, %arg1 : i32, i32, i32
  }
}

module attributes {stable_mosaic.version = 11 : i64} {
  func.func @_bn_relu_kernel(%arg0: i32, %arg1: i32, %arg2: memref<1x32x16xf32, #tpu.memory_space<vmem>>, %arg3: memref<32x1xf32, #tpu.memory_space<vmem>>, %arg4: memref<32x1xf32, #tpu.memory_space<vmem>>, %arg5: memref<1x32x16xf32, #tpu.memory_space<vmem>>) attributes {dimension_semantics = [#tpu.dimension_semantics<parallel>, #tpu.dimension_semantics<parallel>], iteration_bounds = array<i64: 2, 1>, scalar_prefetch = 0 : i64, scratch_operands = 0 : i64, tpu.core_type = #tpu.core_type<tc>, window_params = [{transform_indices = @transform_0, window_bounds = array<i64: 1, 32, 16>}, {pipeline_mode = #tpu.pipeline_mode<synchronous>, transform_indices = @transform_1, window_bounds = array<i64: 32, 1>}, {pipeline_mode = #tpu.pipeline_mode<synchronous>, transform_indices = @transform_2, window_bounds = array<i64: 32, 1>}, {transform_indices = @transform_3, window_bounds = array<i64: 1, 32, 16>}]} {
    %c0 = arith.constant 0 : index
    %c0_0 = arith.constant 0 : index
    %c0_1 = arith.constant 0 : index
    %0 = vector.load %arg2[%c0, %c0_0, %c0_1] : memref<1x32x16xf32, #tpu.memory_space<vmem>>, vector<1x32x16xf32>
    %1 = vector.shape_cast %0 : vector<1x32x16xf32> to vector<32x16xf32>
    %c0_2 = arith.constant 0 : index
    %c0_3 = arith.constant 0 : index
    %2 = vector.load %arg3[%c0_2, %c0_3] : memref<32x1xf32, #tpu.memory_space<vmem>>, vector<32x1xf32>
    %3 = vector.broadcast %2 : vector<32x1xf32> to vector<32x16xf32>
    %4 = arith.mulf %1, %3 : vector<32x16xf32>
    %c0_4 = arith.constant 0 : index
    %c0_5 = arith.constant 0 : index
    %5 = vector.load %arg4[%c0_4, %c0_5] : memref<32x1xf32, #tpu.memory_space<vmem>>, vector<32x1xf32>
    %6 = vector.broadcast %5 : vector<32x1xf32> to vector<32x16xf32>
    %7 = arith.addf %4, %6 : vector<32x16xf32>
    %cst = arith.constant 0.000000e+00 : f32
    %8 = vector.broadcast %cst : f32 to vector<32x16xf32>
    %9 = arith.maximumf %7, %8 : vector<32x16xf32>
    %c0_6 = arith.constant 0 : index
    %c0_7 = arith.constant 0 : index
    %c0_8 = arith.constant 0 : index
    %10 = vector.load %arg5[%c0_6, %c0_7, %c0_8] : memref<1x32x16xf32, #tpu.memory_space<vmem>>, vector<1x32x16xf32>
    %11 = vector.shape_cast %10 : vector<1x32x16xf32> to vector<32x16xf32>
    %12 = vector.shape_cast %9 : vector<32x16xf32> to vector<1x32x16xf32>
    tpu.vector_store %arg5[%c0_6, %c0_7, %c0_8], %12 {strides = array<i32>} : memref<1x32x16xf32, #tpu.memory_space<vmem>>, vector<1x32x16xf32>,
    return
  }
  func.func @transform_0(%arg0: i32, %arg1: i32) -> (i32, i32, i32) {
    %c0_i32 = arith.constant 0 : i32
    %c0_i32_0 = arith.constant 0 : i32
    return %arg0, %c0_i32, %arg1 : i32, i32, i32
  }
  func.func @transform_1(%arg0: i32, %arg1: i32) -> (i32, i32) {
    %c0_i32 = arith.constant 0 : i32
    %c0_i32_0 = arith.constant 0 : i32
    %c0_i32_1 = arith.constant 0 : i32
    return %c0_i32, %c0_i32_0 : i32, i32
  }
  func.func @transform_2(%arg0: i32, %arg1: i32) -> (i32, i32) {
    %c0_i32 = arith.constant 0 : i32
    %c0_i32_0 = arith.constant 0 : i32
    %c0_i32_1 = arith.constant 0 : i32
    return %c0_i32, %c0_i32_0 : i32, i32
  }
  func.func @transform_3(%arg0: i32, %arg1: i32) -> (i32, i32, i32) {
    %c0_i32 = arith.constant 0 : i32
    %c0_i32_0 = arith.constant 0 : i32
    return %arg0, %c0_i32, %arg1 : i32, i32, i32
  }
}

module attributes {stable_mosaic.version = 11 : i64} {
  func.func @_conv_pair_stats_kernel(%arg0: i32, %arg1: i32, %arg2: memref<1x6x16xf32, #tpu.memory_space<vmem>>, %arg3: memref<1x10x16xf32, #tpu.memory_space<vmem>>, %arg4: memref<32x6xf32, #tpu.memory_space<vmem>>, %arg5: memref<32x10xf32, #tpu.memory_space<vmem>>, %arg6: memref<32x1xf32, #tpu.memory_space<vmem>>, %arg7: memref<1x32x16xf32, #tpu.memory_space<vmem>>, %arg8: memref<32x2xf32, #tpu.memory_space<vmem>>) attributes {dimension_semantics = [#tpu.dimension_semantics<arbitrary>, #tpu.dimension_semantics<arbitrary>], iteration_bounds = array<i64: 2, 1>, scalar_prefetch = 0 : i64, scratch_operands = 0 : i64, tpu.core_type = #tpu.core_type<tc>, window_params = [{transform_indices = @transform_0, window_bounds = array<i64: 1, 6, 16>}, {transform_indices = @transform_1, window_bounds = array<i64: 1, 10, 16>}, {pipeline_mode = #tpu.pipeline_mode<synchronous>, transform_indices = @transform_2, window_bounds = array<i64: 32, 6>}, {pipeline_mode = #tpu.pipeline_mode<synchronous>, transform_indices = @transform_3, window_bounds = array<i64: 32, 10>}, {pipeline_mode = #tpu.pipeline_mode<synchronous>, transform_indices = @transform_4, window_bounds = array<i64: 32, 1>}, {transform_indices = @transform_5, window_bounds = array<i64: 1, 32, 16>}, {pipeline_mode = #tpu.pipeline_mode<synchronous>, transform_indices = @transform_6, window_bounds = array<i64: 32, 2>}]} {
    %c0_i32 = arith.constant 0 : i32
    %0 = arith.cmpi eq, %arg0, %c0_i32 : i32
    %c0_i32_0 = arith.constant 0 : i32
    %1 = arith.cmpi eq, %arg1, %c0_i32_0 : i32
    %2 = arith.andi %0, %1 : i1
    %3 = arith.extui %2 : i1 to i32
    %c0_i32_1 = arith.constant 0 : i32
    %4 = arith.cmpi ne, %3, %c0_i32_1 : i32
    scf.if %4 {
      %cst_27 = arith.constant 0.000000e+00 : f32
      %45 = vector.broadcast %cst_27 : f32 to vector<32x2xf32>
      %c0_28 = arith.constant 0 : index
      %c0_29 = arith.constant 0 : index
      %46 = vector.load %arg8[%c0_28, %c0_29] : memref<32x2xf32, #tpu.memory_space<vmem>>, vector<32x2xf32>
      tpu.vector_store %arg8[%c0_28, %c0_29], %45 {strides = array<i32>} : memref<32x2xf32, #tpu.memory_space<vmem>>, vector<32x2xf32>,
    } else {
    }
    %c0 = arith.constant 0 : index
    %c0_2 = arith.constant 0 : index
    %c0_3 = arith.constant 0 : index
    %5 = vector.load %arg2[%c0, %c0_2, %c0_3] : memref<1x6x16xf32, #tpu.memory_space<vmem>>, vector<1x6x16xf32>
    %6 = vector.shape_cast %5 : vector<1x6x16xf32> to vector<6x16xf32>
    %7 = arith.truncf %6 : vector<6x16xf32> to vector<6x16xbf16>
    %c0_4 = arith.constant 0 : index
    %c0_5 = arith.constant 0 : index
    %c0_6 = arith.constant 0 : index
    %8 = vector.load %arg3[%c0_4, %c0_5, %c0_6] : memref<1x10x16xf32, #tpu.memory_space<vmem>>, vector<1x10x16xf32>
    %9 = vector.shape_cast %8 : vector<1x10x16xf32> to vector<10x16xf32>
    %10 = arith.truncf %9 : vector<10x16xf32> to vector<10x16xbf16>
    %c0_7 = arith.constant 0 : index
    %c0_8 = arith.constant 0 : index
    %11 = vector.load %arg4[%c0_7, %c0_8] : memref<32x6xf32, #tpu.memory_space<vmem>>, vector<32x6xf32>
    %12 = arith.truncf %11 : vector<32x6xf32> to vector<32x6xbf16>
    %cst = arith.constant dense<0.000000e+00> : vector<32x16xf32>
    %13 = tpu.matmul %12, %7, %cst {dimension_numbers = #tpu.dot_dimension_numbers<[1], [0], [0], [1], [0, 0, 1, 1], [], []>} : vector<32x6xbf16>, vector<6x16xbf16>, vector<32x16xf32> -> vector<32x16xf32>
    %c0_9 = arith.constant 0 : index
    %c0_10 = arith.constant 0 : index
    %14 = vector.load %arg5[%c0_9, %c0_10] : memref<32x10xf32, #tpu.memory_space<vmem>>, vector<32x10xf32>
    %15 = arith.truncf %14 : vector<32x10xf32> to vector<32x10xbf16>
    %cst_11 = arith.constant dense<0.000000e+00> : vector<32x16xf32>
    %16 = tpu.matmul %15, %10, %cst_11 {dimension_numbers = #tpu.dot_dimension_numbers<[1], [0], [0], [1], [0, 0, 1, 1], [], []>} : vector<32x10xbf16>, vector<10x16xbf16>, vector<32x16xf32> -> vector<32x16xf32>
    %17 = arith.addf %13, %16 : vector<32x16xf32>
    %c0_12 = arith.constant 0 : index
    %c0_13 = arith.constant 0 : index
    %18 = vector.load %arg6[%c0_12, %c0_13] : memref<32x1xf32, #tpu.memory_space<vmem>>, vector<32x1xf32>
    %19 = vector.broadcast %18 : vector<32x1xf32> to vector<32x16xf32>
    %20 = arith.addf %17, %19 : vector<32x16xf32>
    %c0_14 = arith.constant 0 : index
    %c0_15 = arith.constant 0 : index
    %c0_16 = arith.constant 0 : index
    %21 = vector.load %arg7[%c0_14, %c0_15, %c0_16] : memref<1x32x16xf32, #tpu.memory_space<vmem>>, vector<1x32x16xf32>
    %22 = vector.shape_cast %21 : vector<1x32x16xf32> to vector<32x16xf32>
    %23 = vector.shape_cast %20 : vector<32x16xf32> to vector<1x32x16xf32>
    tpu.vector_store %arg7[%c0_14, %c0_15, %c0_16], %23 {strides = array<i32>} : memref<1x32x16xf32, #tpu.memory_space<vmem>>, vector<1x32x16xf32>,
    %24 = tpu.iota {dimensions = array<i32: 1>} : vector<1x16xi32>
    %c16_i32 = arith.constant 16 : i32
    %25 = arith.muli %arg1, %c16_i32 : i32
    %26 = vector.broadcast %25 : i32 to vector<1x16xi32>
    %27 = arith.addi %24, %26 : vector<1x16xi32>
    %c16_i32_17 = arith.constant 16 : i32
    %28 = vector.broadcast %c16_i32_17 : i32 to vector<1x16xi32>
    %29 = arith.cmpi slt, %27, %28 : vector<1x16xi32>
    %30 = arith.extui %29 : vector<1x16xi1> to vector<1x16xi32>
    %31 = arith.sitofp %30 : vector<1x16xi32> to vector<1x16xf32>
    %32 = vector.broadcast %31 : vector<1x16xf32> to vector<32x16xf32>
    %33 = arith.mulf %20, %32 : vector<32x16xf32>
    %c0_18 = arith.constant 0 : index
    %c0_19 = arith.constant 0 : index
    %34 = vector.load %arg8[%c0_18, %c0_19] : memref<32x2xf32, #tpu.memory_space<vmem>>, vector<32x1xf32>
    %cst_20 = arith.constant dense<0.000000e+00> : vector<32xf32>
    %35 = vector.multi_reduction <add>, %33, %cst_20 [1] : vector<32x16xf32> to vector<32xf32>
    %36 = vector.shape_cast %35 : vector<32xf32> to vector<32x1xf32>
    %37 = arith.addf %34, %36 : vector<32x1xf32>
    %c0_21 = arith.constant 0 : index
    %c0_22 = arith.constant 0 : index
    %38 = vector.load %arg8[%c0_21, %c0_22] : memref<32x2xf32, #tpu.memory_space<vmem>>, vector<32x1xf32>
    tpu.vector_store %arg8[%c0_21, %c0_22], %37 {strides = array<i32>} : memref<32x2xf32, #tpu.memory_space<vmem>>, vector<32x1xf32>,
    %c0_23 = arith.constant 0 : index
    %c1 = arith.constant 1 : index
    %39 = vector.load %arg8[%c0_23, %c1] : memref<32x2xf32, #tpu.memory_space<vmem>>, vector<32x1xf32>
    %40 = arith.mulf %33, %33 : vector<32x16xf32>
    %cst_24 = arith.constant dense<0.000000e+00> : vector<32xf32>
    %41 = vector.multi_reduction <add>, %40, %cst_24 [1] : vector<32x16xf32> to vector<32xf32>
    %42 = vector.shape_cast %41 : vector<32xf32> to vector<32x1xf32>
    %43 = arith.addf %39, %42 : vector<32x1xf32>
    %c0_25 = arith.constant 0 : index
    %c1_26 = arith.constant 1 : index
    %44 = vector.load %arg8[%c0_25, %c1_26] : memref<32x2xf32, #tpu.memory_space<vmem>>, vector<32x1xf32>
    tpu.vector_store %arg8[%c0_25, %c1_26], %43 {strides = array<i32>} : memref<32x2xf32, #tpu.memory_space<vmem>>, vector<32x1xf32>,
    return
  }
  func.func @transform_0(%arg0: i32, %arg1: i32) -> (i32, i32, i32) {
    %c0_i32 = arith.constant 0 : i32
    %c0_i32_0 = arith.constant 0 : i32
    return %arg0, %c0_i32, %arg1 : i32, i32, i32
  }
  func.func @transform_1(%arg0: i32, %arg1: i32) -> (i32, i32, i32) {
    %c0_i32 = arith.constant 0 : i32
    %c0_i32_0 = arith.constant 0 : i32
    return %arg0, %c0_i32, %arg1 : i32, i32, i32
  }
  func.func @transform_2(%arg0: i32, %arg1: i32) -> (i32, i32) {
    %c0_i32 = arith.constant 0 : i32
    %c0_i32_0 = arith.constant 0 : i32
    %c0_i32_1 = arith.constant 0 : i32
    return %c0_i32, %c0_i32_0 : i32, i32
  }
  func.func @transform_3(%arg0: i32, %arg1: i32) -> (i32, i32) {
    %c0_i32 = arith.constant 0 : i32
    %c0_i32_0 = arith.constant 0 : i32
    %c0_i32_1 = arith.constant 0 : i32
    return %c0_i32, %c0_i32_0 : i32, i32
  }
  func.func @transform_4(%arg0: i32, %arg1: i32) -> (i32, i32) {
    %c0_i32 = arith.constant 0 : i32
    %c0_i32_0 = arith.constant 0 : i32
    %c0_i32_1 = arith.constant 0 : i32
    return %c0_i32, %c0_i32_0 : i32, i32
  }
  func.func @transform_5(%arg0: i32, %arg1: i32) -> (i32, i32, i32) {
    %c0_i32 = arith.constant 0 : i32
    %c0_i32_0 = arith.constant 0 : i32
    return %arg0, %c0_i32, %arg1 : i32, i32, i32
  }
  func.func @transform_6(%arg0: i32, %arg1: i32) -> (i32, i32) {
    %c0_i32 = arith.constant 0 : i32
    %c0_i32_0 = arith.constant 0 : i32
    %c0_i32_1 = arith.constant 0 : i32
    return %c0_i32, %c0_i32_0 : i32, i32
  }
}

module attributes {stable_mosaic.version = 11 : i64} {
  func.func @_conv_stats_kernel(%arg0: i32, %arg1: i32, %arg2: memref<1x32x16xf32, #tpu.memory_space<vmem>>, %arg3: memref<16x32xf32, #tpu.memory_space<vmem>>, %arg4: memref<16x1xf32, #tpu.memory_space<vmem>>, %arg5: memref<1x16x16xf32, #tpu.memory_space<vmem>>, %arg6: memref<16x2xf32, #tpu.memory_space<vmem>>) attributes {dimension_semantics = [#tpu.dimension_semantics<arbitrary>, #tpu.dimension_semantics<arbitrary>], iteration_bounds = array<i64: 2, 1>, scalar_prefetch = 0 : i64, scratch_operands = 0 : i64, tpu.core_type = #tpu.core_type<tc>, window_params = [{transform_indices = @transform_0, window_bounds = array<i64: 1, 32, 16>}, {pipeline_mode = #tpu.pipeline_mode<synchronous>, transform_indices = @transform_1, window_bounds = array<i64: 16, 32>}, {pipeline_mode = #tpu.pipeline_mode<synchronous>, transform_indices = @transform_2, window_bounds = array<i64: 16, 1>}, {transform_indices = @transform_3, window_bounds = array<i64: 1, 16, 16>}, {pipeline_mode = #tpu.pipeline_mode<synchronous>, transform_indices = @transform_4, window_bounds = array<i64: 16, 2>}]} {
    %c0_i32 = arith.constant 0 : i32
    %0 = arith.cmpi eq, %arg0, %c0_i32 : i32
    %c0_i32_0 = arith.constant 0 : i32
    %1 = arith.cmpi eq, %arg1, %c0_i32_0 : i32
    %2 = arith.andi %0, %1 : i1
    %3 = arith.extui %2 : i1 to i32
    %c0_i32_1 = arith.constant 0 : i32
    %4 = arith.cmpi ne, %3, %c0_i32_1 : i32
    scf.if %4 {
      %cst_21 = arith.constant 0.000000e+00 : f32
      %38 = vector.broadcast %cst_21 : f32 to vector<16x2xf32>
      %c0_22 = arith.constant 0 : index
      %c0_23 = arith.constant 0 : index
      %39 = vector.load %arg6[%c0_22, %c0_23] : memref<16x2xf32, #tpu.memory_space<vmem>>, vector<16x2xf32>
      tpu.vector_store %arg6[%c0_22, %c0_23], %38 {strides = array<i32>} : memref<16x2xf32, #tpu.memory_space<vmem>>, vector<16x2xf32>,
    } else {
    }
    %c0 = arith.constant 0 : index
    %c0_2 = arith.constant 0 : index
    %c0_3 = arith.constant 0 : index
    %5 = vector.load %arg2[%c0, %c0_2, %c0_3] : memref<1x32x16xf32, #tpu.memory_space<vmem>>, vector<1x32x16xf32>
    %6 = vector.shape_cast %5 : vector<1x32x16xf32> to vector<32x16xf32>
    %c0_4 = arith.constant 0 : index
    %c0_5 = arith.constant 0 : index
    %7 = vector.load %arg3[%c0_4, %c0_5] : memref<16x32xf32, #tpu.memory_space<vmem>>, vector<16x32xf32>
    %8 = arith.truncf %7 : vector<16x32xf32> to vector<16x32xbf16>
    %9 = arith.truncf %6 : vector<32x16xf32> to vector<32x16xbf16>
    %cst = arith.constant dense<0.000000e+00> : vector<16x16xf32>
    %10 = tpu.matmul %8, %9, %cst {dimension_numbers = #tpu.dot_dimension_numbers<[1], [0], [0], [1], [0, 0, 1, 1], [], []>} : vector<16x32xbf16>, vector<32x16xbf16>, vector<16x16xf32> -> vector<16x16xf32>
    %c0_6 = arith.constant 0 : index
    %c0_7 = arith.constant 0 : index
    %11 = vector.load %arg4[%c0_6, %c0_7] : memref<16x1xf32, #tpu.memory_space<vmem>>, vector<16x1xf32>
    %12 = vector.broadcast %11 : vector<16x1xf32> to vector<16x16xf32>
    %13 = arith.addf %10, %12 : vector<16x16xf32>
    %c0_8 = arith.constant 0 : index
    %c0_9 = arith.constant 0 : index
    %c0_10 = arith.constant 0 : index
    %14 = vector.load %arg5[%c0_8, %c0_9, %c0_10] : memref<1x16x16xf32, #tpu.memory_space<vmem>>, vector<1x16x16xf32>
    %15 = vector.shape_cast %14 : vector<1x16x16xf32> to vector<16x16xf32>
    %16 = vector.shape_cast %13 : vector<16x16xf32> to vector<1x16x16xf32>
    tpu.vector_store %arg5[%c0_8, %c0_9, %c0_10], %16 {strides = array<i32>} : memref<1x16x16xf32, #tpu.memory_space<vmem>>, vector<1x16x16xf32>,
    %17 = tpu.iota {dimensions = array<i32: 1>} : vector<1x16xi32>
    %c16_i32 = arith.constant 16 : i32
    %18 = arith.muli %arg1, %c16_i32 : i32
    %19 = vector.broadcast %18 : i32 to vector<1x16xi32>
    %20 = arith.addi %17, %19 : vector<1x16xi32>
    %c16_i32_11 = arith.constant 16 : i32
    %21 = vector.broadcast %c16_i32_11 : i32 to vector<1x16xi32>
    %22 = arith.cmpi slt, %20, %21 : vector<1x16xi32>
    %23 = arith.extui %22 : vector<1x16xi1> to vector<1x16xi32>
    %24 = arith.sitofp %23 : vector<1x16xi32> to vector<1x16xf32>
    %25 = vector.broadcast %24 : vector<1x16xf32> to vector<16x16xf32>
    %26 = arith.mulf %13, %25 : vector<16x16xf32>
    %c0_12 = arith.constant 0 : index
    %c0_13 = arith.constant 0 : index
    %27 = vector.load %arg6[%c0_12, %c0_13] : memref<16x2xf32, #tpu.memory_space<vmem>>, vector<16x1xf32>
    %cst_14 = arith.constant dense<0.000000e+00> : vector<16xf32>
    %28 = vector.multi_reduction <add>, %26, %cst_14 [1] : vector<16x16xf32> to vector<16xf32>
    %29 = vector.shape_cast %28 : vector<16xf32> to vector<16x1xf32>
    %30 = arith.addf %27, %29 : vector<16x1xf32>
    %c0_15 = arith.constant 0 : index
    %c0_16 = arith.constant 0 : index
    %31 = vector.load %arg6[%c0_15, %c0_16] : memref<16x2xf32, #tpu.memory_space<vmem>>, vector<16x1xf32>
    tpu.vector_store %arg6[%c0_15, %c0_16], %30 {strides = array<i32>} : memref<16x2xf32, #tpu.memory_space<vmem>>, vector<16x1xf32>,
    %c0_17 = arith.constant 0 : index
    %c1 = arith.constant 1 : index
    %32 = vector.load %arg6[%c0_17, %c1] : memref<16x2xf32, #tpu.memory_space<vmem>>, vector<16x1xf32>
    %33 = arith.mulf %26, %26 : vector<16x16xf32>
    %cst_18 = arith.constant dense<0.000000e+00> : vector<16xf32>
    %34 = vector.multi_reduction <add>, %33, %cst_18 [1] : vector<16x16xf32> to vector<16xf32>
    %35 = vector.shape_cast %34 : vector<16xf32> to vector<16x1xf32>
    %36 = arith.addf %32, %35 : vector<16x1xf32>
    %c0_19 = arith.constant 0 : index
    %c1_20 = arith.constant 1 : index
    %37 = vector.load %arg6[%c0_19, %c1_20] : memref<16x2xf32, #tpu.memory_space<vmem>>, vector<16x1xf32>
    tpu.vector_store %arg6[%c0_19, %c1_20], %36 {strides = array<i32>} : memref<16x2xf32, #tpu.memory_space<vmem>>, vector<16x1xf32>,
    return
  }
  func.func @transform_0(%arg0: i32, %arg1: i32) -> (i32, i32, i32) {
    %c0_i32 = arith.constant 0 : i32
    %c0_i32_0 = arith.constant 0 : i32
    return %arg0, %c0_i32, %arg1 : i32, i32, i32
  }
  func.func @transform_1(%arg0: i32, %arg1: i32) -> (i32, i32) {
    %c0_i32 = arith.constant 0 : i32
    %c0_i32_0 = arith.constant 0 : i32
    %c0_i32_1 = arith.constant 0 : i32
    return %c0_i32, %c0_i32_0 : i32, i32
  }
  func.func @transform_2(%arg0: i32, %arg1: i32) -> (i32, i32) {
    %c0_i32 = arith.constant 0 : i32
    %c0_i32_0 = arith.constant 0 : i32
    %c0_i32_1 = arith.constant 0 : i32
    return %c0_i32, %c0_i32_0 : i32, i32
  }
  func.func @transform_3(%arg0: i32, %arg1: i32) -> (i32, i32, i32) {
    %c0_i32 = arith.constant 0 : i32
    %c0_i32_0 = arith.constant 0 : i32
    return %arg0, %c0_i32, %arg1 : i32, i32, i32
  }
  func.func @transform_4(%arg0: i32, %arg1: i32) -> (i32, i32) {
    %c0_i32 = arith.constant 0 : i32
    %c0_i32_0 = arith.constant 0 : i32
    %c0_i32_1 = arith.constant 0 : i32
    return %c0_i32, %c0_i32_0 : i32, i32
  }
}

module attributes {stable_mosaic.version = 11 : i64} {
  func.func @_bn_relu_kernel(%arg0: i32, %arg1: i32, %arg2: memref<1x16x16xf32, #tpu.memory_space<vmem>>, %arg3: memref<16x1xf32, #tpu.memory_space<vmem>>, %arg4: memref<16x1xf32, #tpu.memory_space<vmem>>, %arg5: memref<1x16x16xf32, #tpu.memory_space<vmem>>) attributes {dimension_semantics = [#tpu.dimension_semantics<parallel>, #tpu.dimension_semantics<parallel>], iteration_bounds = array<i64: 2, 1>, scalar_prefetch = 0 : i64, scratch_operands = 0 : i64, tpu.core_type = #tpu.core_type<tc>, window_params = [{transform_indices = @transform_0, window_bounds = array<i64: 1, 16, 16>}, {pipeline_mode = #tpu.pipeline_mode<synchronous>, transform_indices = @transform_1, window_bounds = array<i64: 16, 1>}, {pipeline_mode = #tpu.pipeline_mode<synchronous>, transform_indices = @transform_2, window_bounds = array<i64: 16, 1>}, {transform_indices = @transform_3, window_bounds = array<i64: 1, 16, 16>}]} {
    %c0 = arith.constant 0 : index
    %c0_0 = arith.constant 0 : index
    %c0_1 = arith.constant 0 : index
    %0 = vector.load %arg2[%c0, %c0_0, %c0_1] : memref<1x16x16xf32, #tpu.memory_space<vmem>>, vector<1x16x16xf32>
    %1 = vector.shape_cast %0 : vector<1x16x16xf32> to vector<16x16xf32>
    %c0_2 = arith.constant 0 : index
    %c0_3 = arith.constant 0 : index
    %2 = vector.load %arg3[%c0_2, %c0_3] : memref<16x1xf32, #tpu.memory_space<vmem>>, vector<16x1xf32>
    %3 = vector.broadcast %2 : vector<16x1xf32> to vector<16x16xf32>
    %4 = arith.mulf %1, %3 : vector<16x16xf32>
    %c0_4 = arith.constant 0 : index
    %c0_5 = arith.constant 0 : index
    %5 = vector.load %arg4[%c0_4, %c0_5] : memref<16x1xf32, #tpu.memory_space<vmem>>, vector<16x1xf32>
    %6 = vector.broadcast %5 : vector<16x1xf32> to vector<16x16xf32>
    %7 = arith.addf %4, %6 : vector<16x16xf32>
    %cst = arith.constant 0.000000e+00 : f32
    %8 = vector.broadcast %cst : f32 to vector<16x16xf32>
    %9 = arith.maximumf %7, %8 : vector<16x16xf32>
    %c0_6 = arith.constant 0 : index
    %c0_7 = arith.constant 0 : index
    %c0_8 = arith.constant 0 : index
    %10 = vector.load %arg5[%c0_6, %c0_7, %c0_8] : memref<1x16x16xf32, #tpu.memory_space<vmem>>, vector<1x16x16xf32>
    %11 = vector.shape_cast %10 : vector<1x16x16xf32> to vector<16x16xf32>
    %12 = vector.shape_cast %9 : vector<16x16xf32> to vector<1x16x16xf32>
    tpu.vector_store %arg5[%c0_6, %c0_7, %c0_8], %12 {strides = array<i32>} : memref<1x16x16xf32, #tpu.memory_space<vmem>>, vector<1x16x16xf32>,
    return
  }
  func.func @transform_0(%arg0: i32, %arg1: i32) -> (i32, i32, i32) {
    %c0_i32 = arith.constant 0 : i32
    %c0_i32_0 = arith.constant 0 : i32
    return %arg0, %c0_i32, %arg1 : i32, i32, i32
  }
  func.func @transform_1(%arg0: i32, %arg1: i32) -> (i32, i32) {
    %c0_i32 = arith.constant 0 : i32
    %c0_i32_0 = arith.constant 0 : i32
    %c0_i32_1 = arith.constant 0 : i32
    return %c0_i32, %c0_i32_0 : i32, i32
  }
  func.func @transform_2(%arg0: i32, %arg1: i32) -> (i32, i32) {
    %c0_i32 = arith.constant 0 : i32
    %c0_i32_0 = arith.constant 0 : i32
    %c0_i32_1 = arith.constant 0 : i32
    return %c0_i32, %c0_i32_0 : i32, i32
  }
  func.func @transform_3(%arg0: i32, %arg1: i32) -> (i32, i32, i32) {
    %c0_i32 = arith.constant 0 : i32
    %c0_i32_0 = arith.constant 0 : i32
    return %arg0, %c0_i32, %arg1 : i32, i32, i32
  }
}

</mosaic_0001>

<llo_original>
// kernel: fp_forward.7
$region0: #{fp_forward.7}
  #allocation0 [shape = 'u32[]', space=smem, size = 0x4, offset = 0x4, fixed_abs, tag = 'smem constant byte address 0x4 - core index']
  #allocation1 [shape = 'u32[144,128]{1,0:T(1,128)}', space=vmem, size = 0x12000, scoped, tag = 'internal scratch']
  %s0 = inlined_call_operand.vmem [shape: f32[2,32,16], index: 0, kind: input, shape index: {}]
  %s1 = inlined_call_operand.vmem [shape: f32[32,1], index: 1, kind: input, shape index: {}]
  %s2 = inlined_call_operand.vmem [shape: f32[32,1], index: 2, kind: input, shape index: {}]
  %s3 = inlined_call_operand.vmem [shape: f32[2,32,16], index: 3, kind: output, shape index: {}]
  %s4 = sld [smem:[#allocation0]]
  $region45: #{fp_forward.7} parent=0
    _
  %s6 = ssub.s32 1, %s4
  %s7 = scalar_select 0, %s6, %s4
  loop: start=0, step=1, limit=4
  $region2: #{fp_forward.7} parent=0 // loop_pre_header
    _
  $region3: #{fp_forward.7} parent=0 // loop_header
    %s9 = sphi 0, %s13
    %p10 = scmp.ge.s32.totalorder %s9, 4
    %s16 = sphi 0, %s28
    %s17 = sphi 0, %s24
    %s18 = sphi 0, %s16
    %s19 = sphi 0, %s17
    %s20 = sphi 0, %s18
    %s21 = sphi 0, %s19
    %s33 = sphi 0, %s35
    %s36 = sphi 0, %s33
    %s37 = sphi 0, %s36
    %s53 = sphi 0, %s37
    %s57 = sphi 0, %s57
    %s59 = sphi 0, %s57
    %s60 = sphi 0, %s59
    %s74 = sphi 0, %s60
    %s78 = sphi 0, %s78
    %s80 = sphi 0, %s78
    %s81 = sphi 0, %s80
    %s95 = sphi 0, %s81
    %s103 = sphi 0, %s105
    %s106 = sphi 0, %s103
    %s107 = sphi 0, %s106
    %s123 = sphi 0, %s107
  $region4: #{fp_forward.7} parent=0 // loop_header_branch
    %12 = sbr.rel (%p10) target = $region8
  $region5: #{fp_forward.7} parent=0 // loop_body
    %s14 = ssub.s32 %s9, 1
    %s15 = ssub.s32 %s9, 2
    %s22 = sadd.s32 1, %s17
    %p23 = scmp.ge.s32.totalorder %s22, 1
    %s24 = scalar_select %p23, 0, %s22
    %s25 = sadd.s32 1, %s16
    %s26 = scalar_select %p23, %s25, %s16
    %p27 = scmp.ge.s32.totalorder %s26, 2
    %s28 = scalar_select %p27, 0, %s26
    %s29 = ssub.s32 %s16, %s28
    %s30 = ssub.s32 %s17, %s24
    %s31 = sor.u32 %s29, %s30
    %p32 = scmp.eq.s32.totalorder %s31, 0
    %s34 = sadd.s32 %s33, 1
    %s35 = scalar_select %p32, %s33, %s34
    %p38 = pneg %p32
    %p39 = scmp.eq.s32.totalorder %s9, 1
    %p40 = por %p38, %p39
    %p41 = scmp.ne.s32.totalorder %s33, %s36
    %p42 = scmp.eq.s32.totalorder %s9, 0
    %p43 = por %p41, %p42
    %p44 = scmp.ne.s32.totalorder %s33, %s36
    %p45 = scmp.eq.s32.totalorder %s14, 1
    %p46 = por %p44, %p45
    %p47 = scmp.ne.s32.totalorder %s36, %s37
    %p48 = scmp.eq.s32.totalorder %s14, 0
    %p49 = por %p47, %p48
    %p50 = scmp.ne.s32.totalorder %s36, %s37
    %p51 = scmp.eq.s32.totalorder %s15, 1
    %p52 = por %p50, %p51
    %p54 = scmp.ne.s32.totalorder %s37, %s53
    %p55 = scmp.eq.s32.totalorder %s15, 0
    %p56 = por %p54, %p55
    %s58 = sadd.s32 %s57, 1
    %p61 = scmp.eq.s32.totalorder %s9, 1
    %p62 = scmp.ne.s32.totalorder %s57, %s59
    %p63 = scmp.eq.s32.totalorder %s9, 0
    %p64 = por %p62, %p63
    %p65 = scmp.ne.s32.totalorder %s57, %s59
    %p66 = scmp.eq.s32.totalorder %s14, 1
    %p67 = por %p65, %p66
    %p68 = scmp.ne.s32.totalorder %s59, %s60
    %p69 = scmp.eq.s32.totalorder %s14, 0
    %p70 = por %p68, %p69
    %p71 = scmp.ne.s32.totalorder %s59, %s60
    %p72 = scmp.eq.s32.totalorder %s15, 1
    %p73 = por %p71, %p72
    %p75 = scmp.ne.s32.totalorder %s60, %s74
    %p76 = scmp.eq.s32.totalorder %s15, 0
    %p77 = por %p75, %p76
    %s79 = sadd.s32 %s78, 1
    %p82 = scmp.eq.s32.totalorder %s9, 1
    %p83 = scmp.ne.s32.totalorder %s78, %s80
    %p84 = scmp.eq.s32.totalorder %s9, 0
    %p85 = por %p83, %p84
    %p86 = scmp.ne.s32.totalorder %s78, %s80
    %p87 = scmp.eq.s32.totalorder %s14, 1
    %p88 = por %p86, %p87
    %p89 = scmp.ne.s32.totalorder %s80, %s81
    %p90 = scmp.eq.s32.totalorder %s14, 0
    %p91 = por %p89, %p90
    %p92 = scmp.ne.s32.totalorder %s80, %s81
    %p93 = scmp.eq.s32.totalorder %s15, 1
    %p94 = por %p92, %p93
    %p96 = scmp.ne.s32.totalorder %s81, %s95
    %p97 = scmp.eq.s32.totalorder %s15, 0
    %p98 = por %p96, %p97
    %s99 = ssub.s32 %s16, %s28
    %s100 = ssub.s32 %s17, %s24
    %s101 = sor.u32 %s99, %s100
    %p102 = scmp.eq.s32.totalorder %s101, 0
    %s104 = sadd.s32 %s103, 1
    %s105 = scalar_select %p102, %s103, %s104
    %p108 = pneg %p102
    %p109 = scmp.eq.s32.totalorder %s9, 1
    %p110 = por %p108, %p109
    %p111 = scmp.ne.s32.totalorder %s103, %s106
    %p112 = scmp.eq.s32.totalorder %s9, 0
    %p113 = por %p111, %p112
    %p114 = scmp.ne.s32.totalorder %s103, %s106
    %p115 = scmp.eq.s32.totalorder %s14, 1
    %p116 = por %p114, %p115
    %p117 = scmp.ne.s32.totalorder %s106, %s107
    %p118 = scmp.eq.s32.totalorder %s14, 0
    %p119 = por %p117, %p118
    %p120 = scmp.ne.s32.totalorder %s106, %s107
    %p121 = scmp.eq.s32.totalorder %s15, 1
    %p122 = por %p120, %p121
    %p124 = scmp.ne.s32.totalorder %s107, %s123
    %p125 = scmp.eq.s32.totalorder %s15, 0
    %p126 = por %p124, %p125
    %p127 = scmp.le.s32.totalorder 1, %s9
    %p128 = scmp.lt.s32.totalorder %s9, 3
    %p129 = pnand %p127, %p128
    %p130 = pneg %p129
    // Predicated region
    $region9: #{fp_forward.7} parent=5 // pred_check
      _
    $region10: #{fp_forward.7} parent=5 // pred_check_branch
      %132 = sbr.rel (%p129) target = $region12
    $region11: #{fp_forward.7} parent=5 // pred_region
      %s133 = ssub.s32 %s9, 1
      // Predicated region
      $region13: #{fp_forward.7} parent=11 // pred_check
        %p134 = pneg %p70
      $region14: #{fp_forward.7} parent=11 // pred_check_branch
        %136 = sbr.rel (%p134) target = $region16
      $region15: #{fp_forward.7} parent=11 // pred_region
        _
      $region16: #{fp_forward.7} parent=11 // pred_fallthru
        _
      // Predicated region
      $region17: #{fp_forward.7} parent=11 // pred_check
        %p137 = pneg %p91
      $region18: #{fp_forward.7} parent=11 // pred_check_branch
        %139 = sbr.rel (%p137) target = $region20
      $region19: #{fp_forward.7} parent=11 // pred_region
        _
      $region20: #{fp_forward.7} parent=11 // pred_fallthru
        _
    $region12: #{fp_forward.7} parent=5 // pred_fallthru
      _
    %p140 = scmp.lt.s32.totalorder %s9, 2
    // Predicated region
    $region21: #{fp_forward.7} parent=5 // pred_check
      %p141 = pneg %p140
    $region22: #{fp_forward.7} parent=5 // pred_check_branch
      %143 = sbr.rel (%p141) target = $region24
    $region23: #{fp_forward.7} parent=5 // pred_region
      // Predicated region
      $region25: #{fp_forward.7} parent=23 // pred_check
        %p144 = pneg %p43
      $region26: #{fp_forward.7} parent=23 // pred_check_branch
        %146 = sbr.rel (%p144) target = $region28
      $region27: #{fp_forward.7} parent=23 // pred_region
        %p147 = scmp.lt.s32.totalorder %s16, 1
        %s148 = scalar_select %p147, %s16, 1
        %p149 = scmp.lt.s32.totalorder %s17, 0
        %s150 = scalar_select %p149, %s17, 0
        %s151 = smul.addr %s148, 4
        %s152 = sadd.s32 %s150, %s151
        %s153 = smul.addr %s152, 8
        %s154 = scalar_lea.vmem %s0, %s153
      $region28: #{fp_forward.7} parent=23 // pred_fallthru
        _
    $region24: #{fp_forward.7} parent=5 // pred_fallthru
      _
    %p155 = scmp.le.s32.totalorder 1, %s9
    %p156 = scmp.lt.s32.totalorder %s9, 3
    %p157 = pnand %p155, %p156
    %p158 = pneg %p157
    // Predicated region
    $region29: #{fp_forward.7} parent=5 // pred_check
      _
    $region30: #{fp_forward.7} parent=5 // pred_check_branch
      %160 = sbr.rel (%p157) target = $region32
    $region31: #{fp_forward.7} parent=5 // pred_region
      %s161 = ssub.s32 %s9, 1
      %p162 = scmp.lt.s32.totalorder %s18, 1
      %s163 = scalar_select %p162, %s18, 1
      %p164 = scmp.lt.s32.totalorder %s19, 0
      %s165 = scalar_select %p164, %s19, 0
      %s166 = smul.addr %s163, 4
      %s167 = sadd.s32 %s165, %s166
      %s168 = smul.addr %s167, 8
      %s169 = scalar_lea.vmem %s0, %s168
      %p170 = pneg %p49
      %p171 = pneg %p46
      %p172 = pneg %p70
      %p173 = pneg %p67
      %p174 = pneg %p91
      %p175 = pneg %p88
      %p176 = pneg %p119
      %p177 = pneg %p116
      %p178 = scmp.lt.s32.totalorder %s18, 1
      %s179 = scalar_select %p178, %s18, 1
      %p180 = scmp.lt.s32.totalorder %s19, 0
      %s181 = scalar_select %p180, %s19, 0
      %s182 = smul.addr %s179, 4
      %s183 = sadd.s32 %s181, %s182
      %s184 = smul.addr %s183, 8
      %s185 = scalar_lea.vmem %s3, %s184
      %p186 = scmp.lt.s32.totalorder %s18, 1
      %s187 = scalar_select %p186, %s18, 1
      %p188 = scmp.lt.s32.totalorder %s19, 0
      %s189 = scalar_select %p188, %s19, 0
      %s190 = smul.addr %s187, 4
      %s191 = sadd.s32 %s189, %s190
      %s192 = smul.addr %s191, 8
      %s193 = scalar_lea.vmem %s0, %s192
      %p194 = scmp.lt.s32.totalorder %s18, 1
      %s195 = scalar_select %p194, %s18, 1
      %p196 = scmp.lt.s32.totalorder %s19, 0
      %s197 = scalar_select %p196, %s19, 0
      %s198 = smul.addr %s195, 4
      %s199 = sadd.s32 %s197, %s198
      %s200 = smul.addr %s199, 8
      %s201 = scalar_lea.vmem %s3, %s200
      %v202 = vld [vmem:[%s193] sm:$0xff]
      %v203 = vld [vmem:[%s193 + $0x8] sm:$0xff]
      %v204 = vld [vmem:[%s193 + $0x10] sm:$0xff]
      %v205 = vld [vmem:[%s193 + $0x18] sm:$0xff]
      %v206 = vld [vmem:[%s1] sm:$0xff]
      %v207 = vld [vmem:[%s1 + $0x8] sm:$0xff]
      %v208 = vld [vmem:[%s1 + $0x10] sm:$0xff]
      %v209 = vld [vmem:[%s1 + $0x18] sm:$0xff]
      %211 = vset.pattern.permute.xlu0 0
      %212 = vperm.xlu0 %211, %v206
      %v213 = vpop.permute.xlu0 %212
      %216 = vset.pattern.permute.xlu0 0
      %217 = vperm.xlu0 %216, %v207
      %v218 = vpop.permute.xlu0 %217
      %221 = vset.pattern.permute.xlu0 0
      %222 = vperm.xlu0 %221, %v208
      %v223 = vpop.permute.xlu0 %222
      %226 = vset.pattern.permute.xlu0 0
      %227 = vperm.xlu0 %226, %v209
      %v228 = vpop.permute.xlu0 %227
      %v230 = vmul.f32 %v202, %v213
      %v231 = vmul.f32 %v203, %v218
      %v232 = vmul.f32 %v204, %v223
      %v233 = vmul.f32 %v205, %v228
      %v234 = vld [vmem:[%s2] sm:$0xff]
      %v235 = vld [vmem:[%s2 + $0x8] sm:$0xff]
      %v236 = vld [vmem:[%s2 + $0x10] sm:$0xff]
      %v237 = vld [vmem:[%s2 + $0x18] sm:$0xff]
      %239 = vset.pattern.permute.xlu0 0
      %240 = vperm.xlu0 %239, %v234
      %v241 = vpop.permute.xlu0 %240
      %244 = vset.pattern.permute.xlu0 0
      %245 = vperm.xlu0 %244, %v235
      %v246 = vpop.permute.xlu0 %245
      %249 = vset.pattern.permute.xlu0 0
      %250 = vperm.xlu0 %249, %v236
      %v251 = vpop.permute.xlu0 %250
      %254 = vset.pattern.permute.xlu0 0
      %255 = vperm.xlu0 %254, %v237
      %v256 = vpop.permute.xlu0 %255
      %v258 = vadd.f32 %v230, %v241
      %v259 = vadd.f32 %v231, %v246
      %v260 = vadd.f32 %v232, %v251
      %v261 = vadd.f32 %v233, %v256
      %v262 = vmax.f32 %v258, 0.0
      %v263 = vmax.f32 %v259, 0.0
      %v264 = vmax.f32 %v260, 0.0
      %v265 = vmax.f32 %v261, 0.0
      %vm266 = vcmask 130048
      %267 = vst.msk [vmem:[%s201] sm:$0xff] %vm266, %v262
      %268 = vst.msk [vmem:[%s201 + $0x8] sm:$0xff] %vm266, %v263
      %269 = vst.msk [vmem:[%s201 + $0x10] sm:$0xff] %vm266, %v264
      %270 = vst.msk [vmem:[%s201 + $0x18] sm:$0xff] %vm266, %v265
      %p271 = scmp.lt.s32.totalorder %s18, 1
      %s272 = scalar_select %p271, %s18, 1
      %p273 = scmp.lt.s32.totalorder %s19, 0
      %s274 = scalar_select %p273, %s19, 0
      %s275 = smul.addr %s272, 4
      %s276 = sadd.s32 %s274, %s275
      %s277 = smul.addr %s276, 8
      %s278 = scalar_lea.vmem %s3, %s277
      // Predicated region
      $region33: #{fp_forward.7} parent=31 // pred_check
        %p279 = pneg %p116
      $region34: #{fp_forward.7} parent=31 // pred_check_branch
        %281 = sbr.rel (%p279) target = $region36
      $region35: #{fp_forward.7} parent=31 // pred_region
        _
      $region36: #{fp_forward.7} parent=31 // pred_fallthru
        _
    $region32: #{fp_forward.7} parent=5 // pred_fallthru
      _
    %p282 = scmp.le.s32.totalorder 2, %s9
    // Predicated region
    $region37: #{fp_forward.7} parent=5 // pred_check
      %p283 = pneg %p282
    $region38: #{fp_forward.7} parent=5 // pred_check_branch
      %285 = sbr.rel (%p283) target = $region40
    $region39: #{fp_forward.7} parent=5 // pred_region
      %s286 = ssub.s32 %s9, 2
      // Predicated region
      $region41: #{fp_forward.7} parent=39 // pred_check
        %p287 = pneg %p122
      $region42: #{fp_forward.7} parent=39 // pred_check_branch
        %289 = sbr.rel (%p287) target = $region44
      $region43: #{fp_forward.7} parent=39 // pred_region
        %p290 = scmp.lt.s32.totalorder %s20, 1
        %s291 = scalar_select %p290, %s20, 1
        %p292 = scmp.lt.s32.totalorder %s21, 0
        %s293 = scalar_select %p292, %s21, 0
        %s294 = smul.addr %s291, 4
        %s295 = sadd.s32 %s293, %s294
        %s296 = smul.addr %s295, 8
        %s297 = scalar_lea.vmem %s3, %s296
      $region44: #{fp_forward.7} parent=39 // pred_fallthru
        _
    $region40: #{fp_forward.7} parent=5 // pred_fallthru
      _
  $region6: #{fp_forward.7} parent=0 // loop_footer
    %s13 = sadd.s32 1, %s9
  $region7: #{fp_forward.7} parent=0 // loop_footer_branch
    %8 = sbr.rel target = $region3
  $region8: #{fp_forward.7} parent=0 // loop_exit
    _

// kernel: fp_forward.5
$region0: #{fp_forward.5}
  #allocation0 [shape = 'u32[]', space=smem, size = 0x4, offset = 0x4, fixed_abs, tag = 'smem constant byte address 0x4 - core index']
  #allocation1 [shape = 'u32[144,128]{1,0:T(1,128)}', space=vmem, size = 0x12000, scoped, tag = 'internal scratch']
  %s0 = inlined_call_operand.vmem [shape: f32[2,3,16], index: 0, kind: input, shape index: {}]
  %s1 = inlined_call_operand.vmem [shape: f32[2,3,8], index: 1, kind: input, shape index: {}]
  %s2 = inlined_call_operand.vmem [shape: f32[2,10,8], index: 2, kind: input, shape index: {}]
  %s3 = inlined_call_operand.vmem [shape: f32[2,10,16], index: 3, kind: output, shape index: {}]
  %s4 = sld [smem:[#allocation0]]
  $region45: #{fp_forward.5} parent=0
    _
  %s6 = ssub.s32 1, %s4
  %s7 = scalar_select 0, %s6, %s4
  loop: start=0, step=1, limit=4
  $region2: #{fp_forward.5} parent=0 // loop_pre_header
    _
  $region3: #{fp_forward.5} parent=0 // loop_header
    %s9 = sphi 0, %s13
    %p10 = scmp.ge.s32.totalorder %s9, 4
    %s16 = sphi 0, %s28
    %s17 = sphi 0, %s24
    %s18 = sphi 0, %s16
    %s19 = sphi 0, %s17
    %s20 = sphi 0, %s18
    %s21 = sphi 0, %s19
    %s33 = sphi 0, %s35
    %s36 = sphi 0, %s33
    %s37 = sphi 0, %s36
    %s53 = sphi 0, %s37
    %s59 = sphi 0, %s61
    %s62 = sphi 0, %s59
    %s63 = sphi 0, %s62
    %s79 = sphi 0, %s63
    %s85 = sphi 0, %s87
    %s88 = sphi 0, %s85
    %s89 = sphi 0, %s88
    %s105 = sphi 0, %s89
    %s113 = sphi 0, %s115
    %s116 = sphi 0, %s113
    %s117 = sphi 0, %s116
    %s133 = sphi 0, %s117
  $region4: #{fp_forward.5} parent=0 // loop_header_branch
    %12 = sbr.rel (%p10) target = $region8
  $region5: #{fp_forward.5} parent=0 // loop_body
    %s14 = ssub.s32 %s9, 1
    %s15 = ssub.s32 %s9, 2
    %s22 = sadd.s32 1, %s17
    %p23 = scmp.ge.s32.totalorder %s22, 1
    %s24 = scalar_select %p23, 0, %s22
    %s25 = sadd.s32 1, %s16
    %s26 = scalar_select %p23, %s25, %s16
    %p27 = scmp.ge.s32.totalorder %s26, 2
    %s28 = scalar_select %p27, 0, %s26
    %s29 = ssub.s32 %s16, %s28
    %s30 = ssub.s32 %s17, %s24
    %s31 = sor.u32 %s29, %s30
    %p32 = scmp.eq.s32.totalorder %s31, 0
    %s34 = sadd.s32 %s33, 1
    %s35 = scalar_select %p32, %s33, %s34
    %p38 = pneg %p32
    %p39 = scmp.eq.s32.totalorder %s9, 1
    %p40 = por %p38, %p39
    %p41 = scmp.ne.s32.totalorder %s33, %s36
    %p42 = scmp.eq.s32.totalorder %s9, 0
    %p43 = por %p41, %p42
    %p44 = scmp.ne.s32.totalorder %s33, %s36
    %p45 = scmp.eq.s32.totalorder %s14, 1
    %p46 = por %p44, %p45
    %p47 = scmp.ne.s32.totalorder %s36, %s37
    %p48 = scmp.eq.s32.totalorder %s14, 0
    %p49 = por %p47, %p48
    %p50 = scmp.ne.s32.totalorder %s36, %s37
    %p51 = scmp.eq.s32.totalorder %s15, 1
    %p52 = por %p50, %p51
    %p54 = scmp.ne.s32.totalorder %s37, %s53
    %p55 = scmp.eq.s32.totalorder %s15, 0
    %p56 = por %p54, %p55
    %s57 = ssub.s32 %s16, %s28
    %p58 = scmp.eq.s32.totalorder %s57, 0
    %s60 = sadd.s32 %s59, 1
    %s61 = scalar_select %p58, %s59, %s60
    %p64 = pneg %p58
    %p65 = scmp.eq.s32.totalorder %s9, 1
    %p66 = por %p64, %p65
    %p67 = scmp.ne.s32.totalorder %s59, %s62
    %p68 = scmp.eq.s32.totalorder %s9, 0
    %p69 = por %p67, %p68
    %p70 = scmp.ne.s32.totalorder %s59, %s62
    %p71 = scmp.eq.s32.totalorder %s14, 1
    %p72 = por %p70, %p71
    %p73 = scmp.ne.s32.totalorder %s62, %s63
    %p74 = scmp.eq.s32.totalorder %s14, 0
    %p75 = por %p73, %p74
    %p76 = scmp.ne.s32.totalorder %s62, %s63
    %p77 = scmp.eq.s32.totalorder %s15, 1
    %p78 = por %p76, %p77
    %p80 = scmp.ne.s32.totalorder %s63, %s79
    %p81 = scmp.eq.s32.totalorder %s15, 0
    %p82 = por %p80, %p81
    %s83 = ssub.s32 %s16, %s28
    %p84 = scmp.eq.s32.totalorder %s83, 0
    %s86 = sadd.s32 %s85, 1
    %s87 = scalar_select %p84, %s85, %s86
    %p90 = pneg %p84
    %p91 = scmp.eq.s32.totalorder %s9, 1
    %p92 = por %p90, %p91
    %p93 = scmp.ne.s32.totalorder %s85, %s88
    %p94 = scmp.eq.s32.totalorder %s9, 0
    %p95 = por %p93, %p94
    %p96 = scmp.ne.s32.totalorder %s85, %s88
    %p97 = scmp.eq.s32.totalorder %s14, 1
    %p98 = por %p96, %p97
    %p99 = scmp.ne.s32.totalorder %s88, %s89
    %p100 = scmp.eq.s32.totalorder %s14, 0
    %p101 = por %p99, %p100
    %p102 = scmp.ne.s32.totalorder %s88, %s89
    %p103 = scmp.eq.s32.totalorder %s15, 1
    %p104 = por %p102, %p103
    %p106 = scmp.ne.s32.totalorder %s89, %s105
    %p107 = scmp.eq.s32.totalorder %s15, 0
    %p108 = por %p106, %p107
    %s109 = ssub.s32 %s16, %s28
    %s110 = ssub.s32 %s17, %s24
    %s111 = sor.u32 %s109, %s110
    %p112 = scmp.eq.s32.totalorder %s111, 0
    %s114 = sadd.s32 %s113, 1
    %s115 = scalar_select %p112, %s113, %s114
    %p118 = pneg %p112
    %p119 = scmp.eq.s32.totalorder %s9, 1
    %p120 = por %p118, %p119
    %p121 = scmp.ne.s32.totalorder %s113, %s116
    %p122 = scmp.eq.s32.totalorder %s9, 0
    %p123 = por %p121, %p122
    %p124 = scmp.ne.s32.totalorder %s113, %s116
    %p125 = scmp.eq.s32.totalorder %s14, 1
    %p126 = por %p124, %p125
    %p127 = scmp.ne.s32.totalorder %s116, %s117
    %p128 = scmp.eq.s32.totalorder %s14, 0
    %p129 = por %p127, %p128
    %p130 = scmp.ne.s32.totalorder %s116, %s117
    %p131 = scmp.eq.s32.totalorder %s15, 1
    %p132 = por %p130, %p131
    %p134 = scmp.ne.s32.totalorder %s117, %s133
    %p135 = scmp.eq.s32.totalorder %s15, 0
    %p136 = por %p134, %p135
    %p137 = scmp.le.s32.totalorder 1, %s9
    %p138 = scmp.lt.s32.totalorder %s9, 3
    %p139 = pnand %p137, %p138
    %p140 = pneg %p139
    // Predicated region
    $region9: #{fp_forward.5} parent=5 // pred_check
      _
    $region10: #{fp_forward.5} parent=5 // pred_check_branch
      %142 = sbr.rel (%p139) target = $region12
    $region11: #{fp_forward.5} parent=5 // pred_region
      %s143 = ssub.s32 %s9, 1
    $region12: #{fp_forward.5} parent=5 // pred_fallthru
      _
    %p144 = scmp.lt.s32.totalorder %s9, 2
    // Predicated region
    $region13: #{fp_forward.5} parent=5 // pred_check
      %p145 = pneg %p144
    $region14: #{fp_forward.5} parent=5 // pred_check_branch
      %147 = sbr.rel (%p145) target = $region16
    $region15: #{fp_forward.5} parent=5 // pred_region
      // Predicated region
      $region17: #{fp_forward.5} parent=15 // pred_check
        %p148 = pneg %p43
      $region18: #{fp_forward.5} parent=15 // pred_check_branch
        %150 = sbr.rel (%p148) target = $region20
      $region19: #{fp_forward.5} parent=15 // pred_region
        %p151 = scmp.lt.s32.totalorder %s16, 1
        %s152 = scalar_select %p151, %s16, 1
        %p153 = scmp.lt.s32.totalorder %s17, 0
        %s154 = scalar_select %p153, %s17, 0
        %s155 = sadd.s32 %s154, %s152
        %s156 = smul.addr %s155, 4
        %s157 = scalar_lea.vmem %s0, %s156
      $region20: #{fp_forward.5} parent=15 // pred_fallthru
        _
      // Predicated region
      $region21: #{fp_forward.5} parent=15 // pred_check
        %p158 = pneg %p69
      $region22: #{fp_forward.5} parent=15 // pred_check_branch
        %160 = sbr.rel (%p158) target = $region24
      $region23: #{fp_forward.5} parent=15 // pred_region
        %p161 = scmp.lt.s32.totalorder %s16, 1
        %s162 = scalar_select %p161, %s16, 1
        %s163 = smul.addr %s162, 4
        %s164 = scalar_lea.vmem %s1, %s163
      $region24: #{fp_forward.5} parent=15 // pred_fallthru
        _
      // Predicated region
      $region25: #{fp_forward.5} parent=15 // pred_check
        %p165 = pneg %p95
      $region26: #{fp_forward.5} parent=15 // pred_check_branch
        %167 = sbr.rel (%p165) target = $region28
      $region27: #{fp_forward.5} parent=15 // pred_region
        %p168 = scmp.lt.s32.totalorder %s16, 1
        %s169 = scalar_select %p168, %s16, 1
        %s170 = smul.addr %s169, 2
        %s171 = smul.addr %s170, 8
        %s172 = scalar_lea.vmem %s2, %s171
      $region28: #{fp_forward.5} parent=15 // pred_fallthru
        _
    $region16: #{fp_forward.5} parent=5 // pred_fallthru
      _
    %p173 = scmp.le.s32.totalorder 1, %s9
    %p174 = scmp.lt.s32.totalorder %s9, 3
    %p175 = pnand %p173, %p174
    %p176 = pneg %p175
    // Predicated region
    $region29: #{fp_forward.5} parent=5 // pred_check
      _
    $region30: #{fp_forward.5} parent=5 // pred_check_branch
      %178 = sbr.rel (%p175) target = $region32
    $region31: #{fp_forward.5} parent=5 // pred_region
      %s179 = ssub.s32 %s9, 1
      %p180 = scmp.lt.s32.totalorder %s18, 1
      %s181 = scalar_select %p180, %s18, 1
      %p182 = scmp.lt.s32.totalorder %s19, 0
      %s183 = scalar_select %p182, %s19, 0
      %s184 = sadd.s32 %s183, %s181
      %s185 = smul.addr %s184, 4
      %s186 = scalar_lea.vmem %s0, %s185
      %p187 = pneg %p49
      %p188 = pneg %p46
      %p189 = scmp.lt.s32.totalorder %s18, 1
      %s190 = scalar_select %p189, %s18, 1
      %s191 = smul.addr %s190, 4
      %s192 = scalar_lea.vmem %s1, %s191
      %p193 = pneg %p75
      %p194 = pneg %p72
      %p195 = scmp.lt.s32.totalorder %s18, 1
      %s196 = scalar_select %p195, %s18, 1
      %s197 = smul.addr %s196, 2
      %s198 = smul.addr %s197, 8
      %s199 = scalar_lea.vmem %s2, %s198
      %p200 = pneg %p101
      %p201 = pneg %p98
      %p202 = pneg %p129
      %p203 = pneg %p126
      %p204 = scmp.lt.s32.totalorder %s18, 1
      %s205 = scalar_select %p204, %s18, 1
      %p206 = scmp.lt.s32.totalorder %s19, 0
      %s207 = scalar_select %p206, %s19, 0
      %s208 = smul.addr %s205, 2
      %s209 = sadd.s32 %s207, %s208
      %s210 = smul.addr %s209, 8
      %s211 = scalar_lea.vmem %s3, %s210
      %p212 = scmp.lt.s32.totalorder %s18, 1
      %s213 = scalar_select %p212, %s18, 1
      %p214 = scmp.lt.s32.totalorder %s19, 0
      %s215 = scalar_select %p214, %s19, 0
      %s216 = sadd.s32 %s215, %s213
      %s217 = smul.addr %s216, 4
      %s218 = scalar_lea.vmem %s0, %s217
      %p219 = scmp.lt.s32.totalorder %s18, 1
      %s220 = scalar_select %p219, %s18, 1
      %s221 = smul.addr %s220, 4
      %s222 = scalar_lea.vmem %s1, %s221
      %p223 = scmp.lt.s32.totalorder %s18, 1
      %s224 = scalar_select %p223, %s18, 1
      %s225 = smul.addr %s224, 2
      %s226 = smul.addr %s225, 8
      %s227 = scalar_lea.vmem %s2, %s226
      %p228 = scmp.lt.s32.totalorder %s18, 1
      %s229 = scalar_select %p228, %s18, 1
      %p230 = scmp.lt.s32.totalorder %s19, 0
      %s231 = scalar_select %p230, %s19, 0
      %s232 = smul.addr %s229, 2
      %s233 = sadd.s32 %s231, %s232
      %s234 = smul.addr %s233, 8
      %s235 = scalar_lea.vmem %s3, %s234
      %v236 = vld [vmem:[%s218] sm:$0x7]
      %v237 = vld [vmem:[%s222] sm:$0x7]
      %v238 = vld [vmem:[%s227] sm:$0xff]
      %v239 = vld [vmem:[%s227 + $0x8] sm:$0x3]
      %240 = vxpose.xlu0.b32.start [1/16] %v237, 128
      %241 = vxpose.xlu0.b32.cont [2/16] 0.0, 128
      %242 = vxpose.xlu0.b32.cont [3/16] 0.0, 128
      %243 = vxpose.xlu0.b32.cont [4/16] 0.0, 128
      %244 = vxpose.xlu0.b32.cont [5/16] 0.0, 128
      %245 = vxpose.xlu0.b32.cont [6/16] 0.0, 128
      %246 = vxpose.xlu0.b32.cont [7/16] 0.0, 128
      %247 = vxpose.xlu0.b32.cont [8/16] 0.0, 128
      %248 = vxpose.xlu0.b32.cont [9/16] 0.0, 128
      %249 = vxpose.xlu0.b32.cont [10/16] 0.0, 128
      %250 = vxpose.xlu0.b32.cont [11/16] 0.0, 128
      %251 = vxpose.xlu0.b32.cont [12/16] 0.0, 128
      %252 = vxpose.xlu0.b32.cont [13/16] 0.0, 128
      %253 = vxpose.xlu0.b32.cont [14/16] 0.0, 128
      %254 = vxpose.xlu0.b32.cont [15/16] 0.0, 128
      %255 = vxpose.xlu0.b32.end [16/16] 0.0, 128
      %v256 = vpop.trf.xlu0
      %v257 = vpop.trf.xlu0
      %v258 = vpop.trf.xlu0
      %v259 = vpop.trf.xlu0
      %v260 = vpop.trf.xlu0
      %v261 = vpop.trf.xlu0
      %v262 = vpop.trf.xlu0
      %v263 = vpop.trf.xlu0
      %v264 = vpop.trf.xlu0
      %v265 = vpop.trf.xlu0
      %v266 = vpop.trf.xlu0
      %v267 = vpop.trf.xlu0
      %v268 = vpop.trf.xlu0
      %v269 = vpop.trf.xlu0
      %v270 = vpop.trf.xlu0
      %v271 = vpop.trf.xlu0
      %v272 = vmul.f32 %v236, %v236
      %v274 = vrot.slane %v272, 1
      %v276 = vadd.f32 %v272, %v274
      %v277 = vrot.slane %v272, 2
      %v279 = vadd.f32 %v276, %v277
      %v280 = vmul.f32 %v256, %v256
      %vm281 = vcmask 23552
      %v282 = vsel %vm281, %v280, 0.0
      %283 = vadd.xlane.f32.xlu0 %v282
      %v284 = vpop.xlane.xlu0 %283
      %286 = vset.pattern.permute.xlu0 0
      %287 = vperm.xlu0 %286, %v256
      %v288 = vpop.permute.xlu0 %287
      %v290 = vlaneseq
      %v291 = vshrl.u32 %v290, 7
      %v292 = vsub.s32 0, %v291
      %v293 = vrot.slane %v236, %v292
      %v294 = vmul.f32 %v288, %v293
      %295 = vset.pattern.permute.xlu0 1
      %296 = vperm.xlu0 %295, %v256
      %v297 = vpop.permute.xlu0 %296
      %v299 = vlaneseq
      %v300 = vshrl.u32 %v299, 7
      %v301 = vsub.s32 1, %v300
      %v302 = vrot.slane %v236, %v301
      %v303 = vmul.f32 %v297, %v302
      %v304 = vadd.f32 %v294, %v303
      %305 = vset.pattern.permute.xlu0 2
      %306 = vperm.xlu0 %305, %v256
      %v307 = vpop.permute.xlu0 %306
      %v309 = vlaneseq
      %v310 = vshrl.u32 %v309, 7
      %v311 = vsub.s32 2, %v310
      %v312 = vrot.slane %v236, %v311
      %v313 = vmul.f32 %v307, %v312
      %v314 = vadd.f32 %v304, %v313
      %v315 = vlaneseq
      %v316 = vshrl.u32 %v315, 7
      %v317 = vsub.s32 0, %v316
      %v318 = vrot.slane %v279, %v317
      %v319 = vadd.f32 %v284, %v318
      %v320 = vmul.f32 %v314, 2.0
      %v321 = vsub.f32 %v319, %v320
      %v322 = vmax.f32 %v321, 0.0
      %v323 = vlaneseq
      %v324 = vshrl.u32 %v323, 7
      %vm325 = vcmask 130048
      %v326 = vsel %vm325, %v322, inf
      %v327 = vrot.slane %v326, 4
      %v328 = vmin.f32 %v326, %v327
      %v329 = vrot.slane %v328, 2
      %v330 = vmin.f32 %v328, %v329
      %v331 = vrot.slane %v330, 1
      %v332 = vmin.f32 %v330, %v331
      %vm333 = vcmp.eq.f32.partialorder %v322, %v332
      %v334 = vsel %vm333, %v324, 8
      %v335 = vsel %vm325, %v334, 2147483647
      %v336 = vrot.slane %v335, 4
      %vm337 = vcmp.lt.s32.totalorder %v335, %v336
      %v338 = vsel %vm337, %v335, %v336
      %v339 = vrot.slane %v338, 2
      %vm340 = vcmp.lt.s32.totalorder %v338, %v339
      %v341 = vsel %vm340, %v338, %v339
      %v342 = vrot.slane %v341, 1
      %vm343 = vcmp.lt.s32.totalorder %v341, %v342
      %v344 = vsel %vm343, %v341, %v342
      %vm345 = vcmp.eq.s32.totalorder %v324, %v344
      %v346 = vsel %vm345, 1, 0
      %v347 = vcvt.s32.f32 %v346
      %v348 = vadd.f32 %v332, 1e-08
      %v349 = vrcp.pop %v348
      %v350 = vmul.f32 1.0, %v349
      %v351 = vmul.f32 %v347, %v350
      %v352 = vadd.f32 %v351, 0.0
      %v353 = vadd.f32 %v350, 0.0
      %vm354 = vcmp.gt.f32.partialorder %v347, 0.0
      %v355 = vsel %vm354, 1e+30, %v322
      %v356 = vsel %vm325, %v355, inf
      %v357 = vrot.slane %v356, 4
      %v358 = vmin.f32 %v356, %v357
      %v359 = vrot.slane %v358, 2
      %v360 = vmin.f32 %v358, %v359
      %v361 = vrot.slane %v360, 1
      %v362 = vmin.f32 %v360, %v361
      %vm363 = vcmp.eq.f32.partialorder %v355, %v362
      %v364 = vsel %vm363, %v324, 8
      %v365 = vsel %vm325, %v364, 2147483647
      %v366 = vrot.slane %v365, 4
      %vm367 = vcmp.lt.s32.totalorder %v365, %v366
      %v368 = vsel %vm367, %v365, %v366
      %v369 = vrot.slane %v368, 2
      %vm370 = vcmp.lt.s32.totalorder %v368, %v369
      %v371 = vsel %vm370, %v368, %v369
      %v372 = vrot.slane %v371, 1
      %vm373 = vcmp.lt.s32.totalorder %v371, %v372
      %v374 = vsel %vm373, %v371, %v372
      %vm375 = vcmp.eq.s32.totalorder %v324, %v374
      %v376 = vsel %vm375, 1, 0
      %v377 = vcvt.s32.f32 %v376
      %v378 = vadd.f32 %v362, 1e-08
      %v379 = vrcp.pop %v378
      %v380 = vmul.f32 1.0, %v379
      %v381 = vmul.f32 %v377, %v380
      %v382 = vadd.f32 %v352, %v381
      %v383 = vadd.f32 %v353, %v380
      %vm384 = vcmp.gt.f32.partialorder %v377, 0.0
      %v385 = vsel %vm384, 1e+30, %v355
      %v386 = vsel %vm325, %v385, inf
      %v387 = vrot.slane %v386, 4
      %v388 = vmin.f32 %v386, %v387
      %v389 = vrot.slane %v388, 2
      %v390 = vmin.f32 %v388, %v389
      %v391 = vrot.slane %v390, 1
      %v392 = vmin.f32 %v390, %v391
      %vm393 = vcmp.eq.f32.partialorder %v385, %v392
      %v394 = vsel %vm393, %v324, 8
      %v395 = vsel %vm325, %v394, 2147483647
      %v396 = vrot.slane %v395, 4
      %vm397 = vcmp.lt.s32.totalorder %v395, %v396
      %v398 = vsel %vm397, %v395, %v396
      %v399 = vrot.slane %v398, 2
      %vm400 = vcmp.lt.s32.totalorder %v398, %v399
      %v401 = vsel %vm400, %v398, %v399
      %v402 = vrot.slane %v401, 1
      %vm403 = vcmp.lt.s32.totalorder %v401, %v402
      %v404 = vsel %vm403, %v401, %v402
      %vm405 = vcmp.eq.s32.totalorder %v324, %v404
      %v406 = vsel %vm405, 1, 0
      %v407 = vcvt.s32.f32 %v406
      %v408 = vadd.f32 %v392, 1e-08
      %v409 = vrcp.pop %v408
      %v410 = vmul.f32 1.0, %v409
      %v411 = vmul.f32 %v407, %v410
      %v412 = vadd.f32 %v382, %v411
      %v413 = vadd.f32 %v383, %v410
      %v414 = vrcp.pop %v413
      %v415 = vmul.f32 %v412, %v414
      %vm416 = vcmask 64512
      %v418 = vsel %vm416, %v238, 0
      %v421 = vsel %vm416, %v239, 0
      %423 = vmatprep.subr.mxu0 0.0
      %424 = vmatpush1.msra.mxu0 0.0
      %425 = vmatprep.subr.mxu0 0.0
      %426 = vmatpush1.msra.mxu0 0.0
      %427 = vmatprep.subr.mxu0 0.0
      %428 = vmatpush1.msra.mxu0 0.0
      %429 = vmatprep.subr.mxu0 0.0
      %430 = vmatpush1.msra.mxu0 0.0
      %431 = vmatprep.subr.mxu0 0.0
      %432 = vmatpush1.msra.mxu0 0.0
      %433 = vmatprep.subr.mxu0 0.0
      %434 = vmatpush1.msra.mxu0 0.0
      %435 = vmatprep.subr.mxu0 0.0
      %436 = vmatpush1.msra.mxu0 0.0
      %437 = vmatprep.subr.mxu0 0.0
      %438 = vmatpush1.msra.mxu0 0.0
      %439 = vmatprep.subr.mxu0 0.0
      %440 = vmatpush1.msra.mxu0 0.0
      %441 = vmatprep.subr.mxu0 0.0
      %442 = vmatpush1.msra.mxu0 0.0
      %443 = vmatprep.subr.mxu0 0.0
      %444 = vmatpush1.msra.mxu0 0.0
      %445 = vmatprep.subr.mxu0 0.0
      %446 = vmatpush1.msra.mxu0 0.0
      %447 = vmatprep.subr.mxu0 0.0
      %448 = vmatpush1.msra.mxu0 0.0
      %449 = vmatprep.subr.mxu0 0.0
      %450 = vmatpush1.msra.mxu0 0.0
      %451 = vmatprep.subr.mxu0 0.0
      %452 = vmatpush1.msra.mxu0 0.0
      %453 = vmatprep.subr.mxu0 0.0
      %454 = vmatpush1.msra.mxu0 %v415
      %455 = vmatprep.subr.mxu0 0.0
      %456 = vmatpush2.msra.mxu0 0.0
      %457 = vmatprep.subr.mxu0 0.0
      %458 = vmatpush2.msra.mxu0 0.0
      %459 = vmatprep.subr.mxu0 0.0
      %460 = vmatpush2.msra.mxu0 0.0
      %461 = vmatprep.subr.mxu0 0.0
      %462 = vmatpush2.msra.mxu0 0.0
      %463 = vmatprep.subr.mxu0 0.0
      %464 = vmatpush2.msra.mxu0 0.0
      %465 = vmatprep.subr.mxu0 0.0
      %466 = vmatpush2.msra.mxu0 0.0
      %467 = vmatprep.subr.mxu0 0.0
      %468 = vmatpush2.msra.mxu0 0.0
      %469 = vmatprep.subr.mxu0 0.0
      %470 = vmatpush2.msra.mxu0 0.0
      %471 = vmatprep.subr.mxu0 0.0
      %472 = vmatpush2.msra.mxu0 0.0
      %473 = vmatprep.subr.mxu0 0.0
      %474 = vmatpush2.msra.mxu0 0.0
      %475 = vmatprep.subr.mxu0 0.0
      %476 = vmatpush2.msra.mxu0 0.0
      %477 = vmatprep.subr.mxu0 0.0
      %478 = vmatpush2.msra.mxu0 0.0
      %479 = vmatprep.subr.mxu0 0.0
      %480 = vmatpush2.msra.mxu0 0.0
      %481 = vmatprep.subr.mxu0 0.0
      %482 = vmatpush2.msra.mxu0 0.0
      %483 = vmatprep.subr.mxu0 0.0
      %484 = vmatpush2.msra.mxu0 0.0
      %485 = vmatprep.subr.mxu0 0.0
      %486 = vmatpush2.msra.mxu0 0.0
      %487 = vmatprep.mubr.f32.mxu0 0.0
      %488 = vmatmul.mubr.f32.gmra.mxu0 %v418
      %v489 = vpop.f32.mrf.mxu0
      %v490 = vadd.f32 0.0, %v489
      %v491 = vpop.f32.mrf.mxu0
      %492 = vmatprep.mubr.f32.mxu0 0.0
      %493 = vmatmul.mubr.f32.gmra.mxu0 %v421
      %v494 = vpop.f32.mrf.mxu0
      %v495 = vadd.f32 0.0, %v494
      %v496 = vpop.f32.mrf.mxu0
      %497 = vdwg.mxu0
      %498 = vst.msk [vmem:[%s235] sm:$0xff] %vm325, %v490
      %vm499 = vcmask 123904
      %500 = vst.msk [vmem:[%s235 + $0x8] sm:$0x3] %vm499, %v495
      %p501 = scmp.lt.s32.totalorder %s18, 1
      %s502 = scalar_select %p501, %s18, 1
      %p503 = scmp.lt.s32.totalorder %s19, 0
      %s504 = scalar_select %p503, %s19, 0
      %s505 = smul.addr %s502, 2
      %s506 = sadd.s32 %s504, %s505
      %s507 = smul.addr %s506, 8
      %s508 = scalar_lea.vmem %s3, %s507
      // Predicated region
      $region33: #{fp_forward.5} parent=31 // pred_check
        %p509 = pneg %p126
      $region34: #{fp_forward.5} parent=31 // pred_check_branch
        %511 = sbr.rel (%p509) target = $region36
      $region35: #{fp_forward.5} parent=31 // pred_region
        _
      $region36: #{fp_forward.5} parent=31 // pred_fallthru
        _
    $region32: #{fp_forward.5} parent=5 // pred_fallthru
      _
    %p512 = scmp.le.s32.totalorder 2, %s9
    // Predicated region
    $region37: #{fp_forward.5} parent=5 // pred_check
      %p513 = pneg %p512
    $region38: #{fp_forward.5} parent=5 // pred_check_branch
      %515 = sbr.rel (%p513) target = $region40
    $region39: #{fp_forward.5} parent=5 // pred_region
      %s516 = ssub.s32 %s9, 2
      // Predicated region
      $region41: #{fp_forward.5} parent=39 // pred_check
        %p517 = pneg %p132
      $region42: #{fp_forward.5} parent=39 // pred_check_branch
        %519 = sbr.rel (%p517) target = $region44
      $region43: #{fp_forward.5} parent=39 // pred_region
        %p520 = scmp.lt.s32.totalorder %s20, 1
        %s521 = scalar_select %p520, %s20, 1
        %p522 = scmp.lt.s32.totalorder %s21, 0
        %s523 = scalar_select %p522, %s21, 0
        %s524 = smul.addr %s521, 2
        %s525 = sadd.s32 %s523, %s524
        %s526 = smul.addr %s525, 8
        %s527 = scalar_lea.vmem %s3, %s526
      $region44: #{fp_forward.5} parent=39 // pred_fallthru
        _
    $region40: #{fp_forward.5} parent=5 // pred_fallthru
      _
  $region6: #{fp_forward.5} parent=0 // loop_footer
    %s13 = sadd.s32 1, %s9
  $region7: #{fp_forward.5} parent=0 // loop_footer_branch
    %8 = sbr.rel target = $region3
  $region8: #{fp_forward.5} parent=0 // loop_exit
    _

// kernel: fp_forward.6
$region0: #{fp_forward.6}
  #allocation0 [shape = 'u32[]', space=smem, size = 0x4, offset = 0x4, fixed_abs, tag = 'smem constant byte address 0x4 - core index']
  #allocation1 [shape = 'u32[144,128]{1,0:T(1,128)}', space=vmem, size = 0x12000, scoped, tag = 'internal scratch']
  %s0 = inlined_call_operand.vmem [shape: f32[2,6,16], index: 0, kind: input, shape index: {}]
  %s1 = inlined_call_operand.vmem [shape: f32[2,10,16], index: 1, kind: input, shape index: {}]
  %s2 = inlined_call_operand.vmem [shape: f32[32,6], index: 2, kind: input, shape index: {}]
  %s3 = inlined_call_operand.vmem [shape: f32[32,10], index: 3, kind: input, shape index: {}]
  %s4 = inlined_call_operand.vmem [shape: f32[32,1], index: 4, kind: input, shape index: {}]
  %s5 = inlined_call_operand.vmem [shape: f32[2,32,16], index: 5, kind: output, shape index: {0}]
  %s6 = inlined_call_operand.vmem [shape: f32[32,2], index: 6, kind: output, shape index: {1}]
  %7 = xla_tuple %s5, %s6
  %s8 = sld [smem:[#allocation0]]
  $region65: #{fp_forward.6} parent=0
    _
  %s10 = ssub.s32 1, %s8
  %s11 = scalar_select 0, %s10, %s8
  loop: start=0, step=1, limit=4
  $region2: #{fp_forward.6} parent=0 // loop_pre_header
    _
  $region3: #{fp_forward.6} parent=0 // loop_header
    %s13 = sphi 0, %s17
    %p14 = scmp.ge.s32.totalorder %s13, 4
    %s20 = sphi 0, %s32
    %s21 = sphi 0, %s28
    %s22 = sphi 0, %s20
    %s23 = sphi 0, %s21
    %s24 = sphi 0, %s22
    %s25 = sphi 0, %s23
    %s37 = sphi 0, %s39
    %s40 = sphi 0, %s37
    %s41 = sphi 0, %s40
    %s57 = sphi 0, %s41
    %s65 = sphi 0, %s67
    %s68 = sphi 0, %s65
    %s69 = sphi 0, %s68
    %s85 = sphi 0, %s69
    %s89 = sphi 0, %s89
    %s91 = sphi 0, %s89
    %s92 = sphi 0, %s91
    %s106 = sphi 0, %s92
    %s110 = sphi 0, %s110
    %s112 = sphi 0, %s110
    %s113 = sphi 0, %s112
    %s127 = sphi 0, %s113
    %s131 = sphi 0, %s131
    %s133 = sphi 0, %s131
    %s134 = sphi 0, %s133
    %s148 = sphi 0, %s134
    %s156 = sphi 0, %s158
    %s159 = sphi 0, %s156
    %s160 = sphi 0, %s159
    %s176 = sphi 0, %s160
    %s180 = sphi 0, %s180
    %s182 = sphi 0, %s180
    %s183 = sphi 0, %s182
    %s197 = sphi 0, %s183
  $region4: #{fp_forward.6} parent=0 // loop_header_branch
    %16 = sbr.rel (%p14) target = $region8
  $region5: #{fp_forward.6} parent=0 // loop_body
    %s18 = ssub.s32 %s13, 1
    %s19 = ssub.s32 %s13, 2
    %s26 = sadd.s32 1, %s21
    %p27 = scmp.ge.s32.totalorder %s26, 1
    %s28 = scalar_select %p27, 0, %s26
    %s29 = sadd.s32 1, %s20
    %s30 = scalar_select %p27, %s29, %s20
    %p31 = scmp.ge.s32.totalorder %s30, 2
    %s32 = scalar_select %p31, 0, %s30
    %s33 = ssub.s32 %s20, %s32
    %s34 = ssub.s32 %s21, %s28
    %s35 = sor.u32 %s33, %s34
    %p36 = scmp.eq.s32.totalorder %s35, 0
    %s38 = sadd.s32 %s37, 1
    %s39 = scalar_select %p36, %s37, %s38
    %p42 = pneg %p36
    %p43 = scmp.eq.s32.totalorder %s13, 1
    %p44 = por %p42, %p43
    %p45 = scmp.ne.s32.totalorder %s37, %s40
    %p46 = scmp.eq.s32.totalorder %s13, 0
    %p47 = por %p45, %p46
    %p48 = scmp.ne.s32.totalorder %s37, %s40
    %p49 = scmp.eq.s32.totalorder %s18, 1
    %p50 = por %p48, %p49
    %p51 = scmp.ne.s32.totalorder %s40, %s41
    %p52 = scmp.eq.s32.totalorder %s18, 0
    %p53 = por %p51, %p52
    %p54 = scmp.ne.s32.totalorder %s40, %s41
    %p55 = scmp.eq.s32.totalorder %s19, 1
    %p56 = por %p54, %p55
    %p58 = scmp.ne.s32.totalorder %s41, %s57
    %p59 = scmp.eq.s32.totalorder %s19, 0
    %p60 = por %p58, %p59
    %s61 = ssub.s32 %s20, %s32
    %s62 = ssub.s32 %s21, %s28
    %s63 = sor.u32 %s61, %s62
    %p64 = scmp.eq.s32.totalorder %s63, 0
    %s66 = sadd.s32 %s65, 1
    %s67 = scalar_select %p64, %s65, %s66
    %p70 = pneg %p64
    %p71 = scmp.eq.s32.totalorder %s13, 1
    %p72 = por %p70, %p71
    %p73 = scmp.ne.s32.totalorder %s65, %s68
    %p74 = scmp.eq.s32.totalorder %s13, 0
    %p75 = por %p73, %p74
    %p76 = scmp.ne.s32.totalorder %s65, %s68
    %p77 = scmp.eq.s32.totalorder %s18, 1
    %p78 = por %p76, %p77
    %p79 = scmp.ne.s32.totalorder %s68, %s69
    %p80 = scmp.eq.s32.totalorder %s18, 0
    %p81 = por %p79, %p80
    %p82 = scmp.ne.s32.totalorder %s68, %s69
    %p83 = scmp.eq.s32.totalorder %s19, 1
    %p84 = por %p82, %p83
    %p86 = scmp.ne.s32.totalorder %s69, %s85
    %p87 = scmp.eq.s32.totalorder %s19, 0
    %p88 = por %p86, %p87
    %s90 = sadd.s32 %s89, 1
    %p93 = scmp.eq.s32.totalorder %s13, 1
    %p94 = scmp.ne.s32.totalorder %s89, %s91
    %p95 = scmp.eq.s32.totalorder %s13, 0
    %p96 = por %p94, %p95
    %p97 = scmp.ne.s32.totalorder %s89, %s91
    %p98 = scmp.eq.s32.totalorder %s18, 1
    %p99 = por %p97, %p98
    %p100 = scmp.ne.s32.totalorder %s91, %s92
    %p101 = scmp.eq.s32.totalorder %s18, 0
    %p102 = por %p100, %p101
    %p103 = scmp.ne.s32.totalorder %s91, %s92
    %p104 = scmp.eq.s32.totalorder %s19, 1
    %p105 = por %p103, %p104
    %p107 = scmp.ne.s32.totalorder %s92, %s106
    %p108 = scmp.eq.s32.totalorder %s19, 0
    %p109 = por %p107, %p108
    %s111 = sadd.s32 %s110, 1
    %p114 = scmp.eq.s32.totalorder %s13, 1
    %p115 = scmp.ne.s32.totalorder %s110, %s112
    %p116 = scmp.eq.s32.totalorder %s13, 0
    %p117 = por %p115, %p116
    %p118 = scmp.ne.s32.totalorder %s110, %s112
    %p119 = scmp.eq.s32.totalorder %s18, 1
    %p120 = por %p118, %p119
    %p121 = scmp.ne.s32.totalorder %s112, %s113
    %p122 = scmp.eq.s32.totalorder %s18, 0
    %p123 = por %p121, %p122
    %p124 = scmp.ne.s32.totalorder %s112, %s113
    %p125 = scmp.eq.s32.totalorder %s19, 1
    %p126 = por %p124, %p125
    %p128 = scmp.ne.s32.totalorder %s113, %s127
    %p129 = scmp.eq.s32.totalorder %s19, 0
    %p130 = por %p128, %p129
    %s132 = sadd.s32 %s131, 1
    %p135 = scmp.eq.s32.totalorder %s13, 1
    %p136 = scmp.ne.s32.totalorder %s131, %s133
    %p137 = scmp.eq.s32.totalorder %s13, 0
    %p138 = por %p136, %p137
    %p139 = scmp.ne.s32.totalorder %s131, %s133
    %p140 = scmp.eq.s32.totalorder %s18, 1
    %p141 = por %p139, %p140
    %p142 = scmp.ne.s32.totalorder %s133, %s134
    %p143 = scmp.eq.s32.totalorder %s18, 0
    %p144 = por %p142, %p143
    %p145 = scmp.ne.s32.totalorder %s133, %s134
    %p146 = scmp.eq.s32.totalorder %s19, 1
    %p147 = por %p145, %p146
    %p149 = scmp.ne.s32.totalorder %s134, %s148
    %p150 = scmp.eq.s32.totalorder %s19, 0
    %p151 = por %p149, %p150
    %s152 = ssub.s32 %s20, %s32
    %s153 = ssub.s32 %s21, %s28
    %s154 = sor.u32 %s152, %s153
    %p155 = scmp.eq.s32.totalorder %s154, 0
    %s157 = sadd.s32 %s156, 1
    %s158 = scalar_select %p155, %s156, %s157
    %p161 = pneg %p155
    %p162 = scmp.eq.s32.totalorder %s13, 1
    %p163 = por %p161, %p162
    %p164 = scmp.ne.s32.totalorder %s156, %s159
    %p165 = scmp.eq.s32.totalorder %s13, 0
    %p166 = por %p164, %p165
    %p167 = scmp.ne.s32.totalorder %s156, %s159
    %p168 = scmp.eq.s32.totalorder %s18, 1
    %p169 = por %p167, %p168
    %p170 = scmp.ne.s32.totalorder %s159, %s160
    %p171 = scmp.eq.s32.totalorder %s18, 0
    %p172 = por %p170, %p171
    %p173 = scmp.ne.s32.totalorder %s159, %s160
    %p174 = scmp.eq.s32.totalorder %s19, 1
    %p175 = por %p173, %p174
    %p177 = scmp.ne.s32.totalorder %s160, %s176
    %p178 = scmp.eq.s32.totalorder %s19, 0
    %p179 = por %p177, %p178
    %s181 = sadd.s32 %s180, 1
    %p184 = scmp.eq.s32.totalorder %s13, 1
    %p185 = scmp.ne.s32.totalorder %s180, %s182
    %p186 = scmp.eq.s32.totalorder %s13, 0
    %p187 = por %p185, %p186
    %p188 = scmp.ne.s32.totalorder %s180, %s182
    %p189 = scmp.eq.s32.totalorder %s18, 1
    %p190 = por %p188, %p189
    %p191 = scmp.ne.s32.totalorder %s182, %s183
    %p192 = scmp.eq.s32.totalorder %s18, 0
    %p193 = por %p191, %p192
    %p194 = scmp.ne.s32.totalorder %s182, %s183
    %p195 = scmp.eq.s32.totalorder %s19, 1
    %p196 = por %p194, %p195
    %p198 = scmp.ne.s32.totalorder %s183, %s197
    %p199 = scmp.eq.s32.totalorder %s19, 0
    %p200 = por %p198, %p199
    %p201 = scmp.le.s32.totalorder 1, %s13
    %p202 = scmp.lt.s32.totalorder %s13, 3
    %p203 = pnand %p201, %p202
    %p204 = pneg %p203
    // Predicated region
    $region9: #{fp_forward.6} parent=5 // pred_check
      _
    $region10: #{fp_forward.6} parent=5 // pred_check_branch
      %206 = sbr.rel (%p203) target = $region12
    $region11: #{fp_forward.6} parent=5 // pred_region
      %s207 = ssub.s32 %s13, 1
      // Predicated region
      $region13: #{fp_forward.6} parent=11 // pred_check
        %p208 = pneg %p102
      $region14: #{fp_forward.6} parent=11 // pred_check_branch
        %210 = sbr.rel (%p208) target = $region16
      $region15: #{fp_forward.6} parent=11 // pred_region
        _
      $region16: #{fp_forward.6} parent=11 // pred_fallthru
        _
      // Predicated region
      $region17: #{fp_forward.6} parent=11 // pred_check
        %p211 = pneg %p123
      $region18: #{fp_forward.6} parent=11 // pred_check_branch
        %213 = sbr.rel (%p211) target = $region20
      $region19: #{fp_forward.6} parent=11 // pred_region
        _
      $region20: #{fp_forward.6} parent=11 // pred_fallthru
        _
      // Predicated region
      $region21: #{fp_forward.6} parent=11 // pred_check
        %p214 = pneg %p144
      $region22: #{fp_forward.6} parent=11 // pred_check_branch
        %216 = sbr.rel (%p214) target = $region24
      $region23: #{fp_forward.6} parent=11 // pred_region
        _
      $region24: #{fp_forward.6} parent=11 // pred_fallthru
        _
    $region12: #{fp_forward.6} parent=5 // pred_fallthru
      _
    %p217 = scmp.lt.s32.totalorder %s13, 2
    // Predicated region
    $region25: #{fp_forward.6} parent=5 // pred_check
      %p218 = pneg %p217
    $region26: #{fp_forward.6} parent=5 // pred_check_branch
      %220 = sbr.rel (%p218) target = $region28
    $region27: #{fp_forward.6} parent=5 // pred_region
      // Predicated region
      $region29: #{fp_forward.6} parent=27 // pred_check
        %p221 = pneg %p47
      $region30: #{fp_forward.6} parent=27 // pred_check_branch
        %223 = sbr.rel (%p221) target = $region32
      $region31: #{fp_forward.6} parent=27 // pred_region
        %p224 = scmp.lt.s32.totalorder %s20, 1
        %s225 = scalar_select %p224, %s20, 1
        %p226 = scmp.lt.s32.totalorder %s21, 0
        %s227 = scalar_select %p226, %s21, 0
        %s228 = sadd.s32 %s227, %s225
        %s229 = smul.addr %s228, 8
        %s230 = scalar_lea.vmem %s0, %s229
      $region32: #{fp_forward.6} parent=27 // pred_fallthru
        _
      // Predicated region
      $region33: #{fp_forward.6} parent=27 // pred_check
        %p231 = pneg %p75
      $region34: #{fp_forward.6} parent=27 // pred_check_branch
        %233 = sbr.rel (%p231) target = $region36
      $region35: #{fp_forward.6} parent=27 // pred_region
        %p234 = scmp.lt.s32.totalorder %s20, 1
        %s235 = scalar_select %p234, %s20, 1
        %p236 = scmp.lt.s32.totalorder %s21, 0
        %s237 = scalar_select %p236, %s21, 0
        %s238 = smul.addr %s235, 2
        %s239 = sadd.s32 %s237, %s238
        %s240 = smul.addr %s239, 8
        %s241 = scalar_lea.vmem %s1, %s240
      $region36: #{fp_forward.6} parent=27 // pred_fallthru
        _
    $region28: #{fp_forward.6} parent=5 // pred_fallthru
      _
    %p242 = scmp.le.s32.totalorder 1, %s13
    %p243 = scmp.lt.s32.totalorder %s13, 3
    %p244 = pnand %p242, %p243
    %p245 = pneg %p244
    // Predicated region
    $region37: #{fp_forward.6} parent=5 // pred_check
      _
    $region38: #{fp_forward.6} parent=5 // pred_check_branch
      %247 = sbr.rel (%p244) target = $region40
    $region39: #{fp_forward.6} parent=5 // pred_region
      %s248 = ssub.s32 %s13, 1
      %p249 = scmp.lt.s32.totalorder %s22, 1
      %s250 = scalar_select %p249, %s22, 1
      %p251 = scmp.lt.s32.totalorder %s23, 0
      %s252 = scalar_select %p251, %s23, 0
      %s253 = sadd.s32 %s252, %s250
      %s254 = smul.addr %s253, 8
      %s255 = scalar_lea.vmem %s0, %s254
      %p256 = pneg %p53
      %p257 = pneg %p50
      %p258 = scmp.lt.s32.totalorder %s22, 1
      %s259 = scalar_select %p258, %s22, 1
      %p260 = scmp.lt.s32.totalorder %s23, 0
      %s261 = scalar_select %p260, %s23, 0
      %s262 = smul.addr %s259, 2
      %s263 = sadd.s32 %s261, %s262
      %s264 = smul.addr %s263, 8
      %s265 = scalar_lea.vmem %s1, %s264
      %p266 = pneg %p81
      %p267 = pneg %p78
      %p268 = pneg %p102
      %p269 = pneg %p99
      %p270 = pneg %p123
      %p271 = pneg %p120
      %p272 = pneg %p144
      %p273 = pneg %p141
      %p274 = pneg %p172
      %p275 = pneg %p169
      %p276 = scmp.lt.s32.totalorder %s22, 1
      %s277 = scalar_select %p276, %s22, 1
      %p278 = scmp.lt.s32.totalorder %s23, 0
      %s279 = scalar_select %p278, %s23, 0
      %s280 = smul.addr %s277, 4
      %s281 = sadd.s32 %s279, %s280
      %s282 = smul.addr %s281, 8
      %s283 = scalar_lea.vmem %s5, %s282
      %p284 = pneg %p193
      %p285 = pneg %p190
      %p286 = scmp.lt.s32.totalorder %s22, 1
      %s287 = scalar_select %p286, %s22, 1
      %p288 = scmp.lt.s32.totalorder %s23, 0
      %s289 = scalar_select %p288, %s23, 0
      %s290 = sadd.s32 %s289, %s287
      %s291 = smul.addr %s290, 8
      %s292 = scalar_lea.vmem %s0, %s291
      %p293 = scmp.lt.s32.totalorder %s22, 1
      %s294 = scalar_select %p293, %s22, 1
      %p295 = scmp.lt.s32.totalorder %s23, 0
      %s296 = scalar_select %p295, %s23, 0
      %s297 = smul.addr %s294, 2
      %s298 = sadd.s32 %s296, %s297
      %s299 = smul.addr %s298, 8
      %s300 = scalar_lea.vmem %s1, %s299
      %p301 = scmp.lt.s32.totalorder %s22, 1
      %s302 = scalar_select %p301, %s22, 1
      %p303 = scmp.lt.s32.totalorder %s23, 0
      %s304 = scalar_select %p303, %s23, 0
      %s305 = smul.addr %s302, 4
      %s306 = sadd.s32 %s304, %s305
      %s307 = smul.addr %s306, 8
      %s308 = scalar_lea.vmem %s5, %s307
      %p310 = scmp.eq.s32.totalorder %s22, 0
      %p311 = scmp.eq.s32.totalorder %s23, 0
      %p312 = pnand %p310, %p311
      %p313 = pneg %p312
      // Predicated region
      $region41: #{fp_forward.6} parent=39 // pred_check
        _
      $region42: #{fp_forward.6} parent=39 // pred_check_branch
        %315 = sbr.rel (%p312) target = $region44
      $region43: #{fp_forward.6} parent=39 // pred_region
        %vm316 = vcmask 15360
        %317 = vst.msk [vmem:[%s6] sm:$0xff] %vm316, 0.0
        %318 = vst.msk [vmem:[%s6 + $0x8] sm:$0xff] %vm316, 0.0
        %319 = vst.msk [vmem:[%s6 + $0x10] sm:$0xff] %vm316, 0.0
        %320 = vst.msk [vmem:[%s6 + $0x18] sm:$0xff] %vm316, 0.0
      $region44: #{fp_forward.6} parent=39 // pred_fallthru
        _
      %v321 = vld [vmem:[%s292] sm:$0x3f]
      %v322 = vpack.c.bf16 %v321, %v321
      %v323 = vld [vmem:[%s300] sm:$0xff]
      %v324 = vld [vmem:[%s300 + $0x8] sm:$0x3]
      %v325 = vpack.c.bf16 %v324, %v323
      %v326 = vld [vmem:[%s2] sm:$0xff]
      %v327 = vld [vmem:[%s2 + $0x8] sm:$0xff]
      %v328 = vld [vmem:[%s2 + $0x10] sm:$0xff]
      %v329 = vld [vmem:[%s2 + $0x18] sm:$0xff]
      %v330 = vpack.c.bf16 %v327, %v326
      %v331 = vpack.c.bf16 %v329, %v328
      %v332 = vld [vmem:[%s3] sm:$0xff]
      %v333 = vld [vmem:[%s3 + $0x8] sm:$0xff]
      %v334 = vld [vmem:[%s3 + $0x10] sm:$0xff]
      %v335 = vld [vmem:[%s3 + $0x18] sm:$0xff]
      %v336 = vpack.c.bf16 %v333, %v332
      %v337 = vpack.c.bf16 %v335, %v334
      %vm338 = vcmask 80896
      %v340 = vsel %vm338, %v336, 0
      %v343 = vsel %vm338, %v337, 0
      %vm345 = vcmask 1044480
      %v347 = vsel %vm345, %v325, 0
      %349 = vmatprep.subr.bf16.mxu0 0
      %350 = vmatpush1.bf16.msra.mxu0 0
      %351 = vmatprep.subr.bf16.mxu0 0
      %352 = vmatpush1.bf16.msra.mxu0 0
      %353 = vmatprep.subr.bf16.mxu0 0
      %354 = vmatpush1.bf16.msra.mxu0 0
      %355 = vmatprep.subr.bf16.mxu0 0
      %356 = vmatpush1.bf16.msra.mxu0 0
      %357 = vmatprep.subr.bf16.mxu0 0
      %358 = vmatpush1.bf16.msra.mxu0 0
      %359 = vmatprep.subr.bf16.mxu0 0
      %360 = vmatpush1.bf16.msra.mxu0 0
      %361 = vmatprep.subr.bf16.mxu0 0
      %362 = vmatpush1.bf16.msra.mxu0 0
      %363 = vmatprep.subr.bf16.mxu0 0
      %364 = vmatpush1.bf16.msra.mxu0 %v347
      %365 = vmatprep.subr.bf16.mxu0 0
      %366 = vmatpush2.bf16.msra.mxu0 0
      %367 = vmatprep.subr.bf16.mxu0 0
      %368 = vmatpush2.bf16.msra.mxu0 0
      %369 = vmatprep.subr.bf16.mxu0 0
      %370 = vmatpush2.bf16.msra.mxu0 0
      %371 = vmatprep.subr.bf16.mxu0 0
      %372 = vmatpush2.bf16.msra.mxu0 0
      %373 = vmatprep.subr.bf16.mxu0 0
      %374 = vmatpush2.bf16.msra.mxu0 0
      %375 = vmatprep.subr.bf16.mxu0 0
      %376 = vmatpush2.bf16.msra.mxu0 0
      %377 = vmatprep.subr.bf16.mxu0 0
      %378 = vmatpush2.bf16.msra.mxu0 0
      %379 = vmatprep.subr.bf16.mxu0 0
      %380 = vmatpush2.bf16.msra.mxu0 0
      %381 = vmatprep.mubr.bf16.mxu0 0
      %382 = vmatmul.mubr.bf16.gmra.mxu0 %v340
      %v383 = vpop.f32.mrf.mxu0
      %v384 = vadd.f32 0.0, %v383
      %v385 = vpop.f32.mrf.mxu0
      %v386 = vpop.f32.mrf.mxu0
      %v387 = vadd.f32 0.0, %v386
      %v388 = vpop.f32.mrf.mxu0
      %389 = vmatprep.mubr.bf16.mxu0 0
      %390 = vmatmul.mubr.bf16.gmra.mxu0 %v343
      %v391 = vpop.f32.mrf.mxu0
      %v392 = vadd.f32 0.0, %v391
      %v393 = vpop.f32.mrf.mxu0
      %v394 = vpop.f32.mrf.mxu0
      %v395 = vadd.f32 0.0, %v394
      %v396 = vpop.f32.mrf.mxu0
      %397 = vdwg.mxu0
      %vm398 = vcmask 48128
      %v400 = vsel %vm398, %v330, 0
      %v403 = vsel %vm398, %v331, 0
      %vm405 = vcmask 1042432
      %v407 = vsel %vm405, %v322, 0
      %409 = vmatprep.subr.bf16.mxu0 0
      %410 = vmatpush1.bf16.msra.mxu0 0
      %411 = vmatprep.subr.bf16.mxu0 0
      %412 = vmatpush1.bf16.msra.mxu0 0
      %413 = vmatprep.subr.bf16.mxu0 0
      %414 = vmatpush1.bf16.msra.mxu0 0
      %415 = vmatprep.subr.bf16.mxu0 0
      %416 = vmatpush1.bf16.msra.mxu0 0
      %417 = vmatprep.subr.bf16.mxu0 0
      %418 = vmatpush1.bf16.msra.mxu0 0
      %419 = vmatprep.subr.bf16.mxu0 0
      %420 = vmatpush1.bf16.msra.mxu0 0
      %421 = vmatprep.subr.bf16.mxu0 0
      %422 = vmatpush1.bf16.msra.mxu0 0
      %423 = vmatprep.subr.bf16.mxu0 0
      %424 = vmatpush1.bf16.msra.mxu0 %v407
      %425 = vmatprep.subr.bf16.mxu0 0
      %426 = vmatpush2.bf16.msra.mxu0 0
      %427 = vmatprep.subr.bf16.mxu0 0
      %428 = vmatpush2.bf16.msra.mxu0 0
      %429 = vmatprep.subr.bf16.mxu0 0
      %430 = vmatpush2.bf16.msra.mxu0 0
      %431 = vmatprep.subr.bf16.mxu0 0
      %432 = vmatpush2.bf16.msra.mxu0 0
      %433 = vmatprep.subr.bf16.mxu0 0
      %434 = vmatpush2.bf16.msra.mxu0 0
      %435 = vmatprep.subr.bf16.mxu0 0
      %436 = vmatpush2.bf16.msra.mxu0 0
      %437 = vmatprep.subr.bf16.mxu0 0
      %438 = vmatpush2.bf16.msra.mxu0 0
      %439 = vmatprep.subr.bf16.mxu0 0
      %440 = vmatpush2.bf16.msra.mxu0 0
      %441 = vmatprep.mubr.bf16.mxu0 0
      %442 = vmatmul.mubr.bf16.gmra.mxu0 %v400
      %v443 = vpop.f32.mrf.mxu0
      %v444 = vadd.f32 %v384, %v443
      %v445 = vpop.f32.mrf.mxu0
      %v446 = vpop.f32.mrf.mxu0
      %v447 = vadd.f32 %v387, %v446
      %v448 = vpop.f32.mrf.mxu0
      %449 = vmatprep.mubr.bf16.mxu0 0
      %450 = vmatmul.mubr.bf16.gmra.mxu0 %v403
      %v451 = vpop.f32.mrf.mxu0
      %v452 = vadd.f32 %v392, %v451
      %v453 = vpop.f32.mrf.mxu0
      %v454 = vpop.f32.mrf.mxu0
      %v455 = vadd.f32 %v395, %v454
      %v456 = vpop.f32.mrf.mxu0
      %457 = vdwg.mxu0
      %v458 = vld [vmem:[%s4] sm:$0xff]
      %v459 = vld [vmem:[%s4 + $0x8] sm:$0xff]
      %v460 = vld [vmem:[%s4 + $0x10] sm:$0xff]
      %v461 = vld [vmem:[%s4 + $0x18] sm:$0xff]
      %463 = vset.pattern.permute.xlu0 0
      %464 = vperm.xlu0 %463, %v458
      %v465 = vpop.permute.xlu0 %464
      %468 = vset.pattern.permute.xlu0 0
      %469 = vperm.xlu0 %468, %v459
      %v470 = vpop.permute.xlu0 %469
      %473 = vset.pattern.permute.xlu0 0
      %474 = vperm.xlu0 %473, %v460
      %v475 = vpop.permute.xlu0 %474
      %478 = vset.pattern.permute.xlu0 0
      %479 = vperm.xlu0 %478, %v461
      %v480 = vpop.permute.xlu0 %479
      %v482 = vadd.f32 %v444, %v465
      %v483 = vadd.f32 %v447, %v470
      %v484 = vadd.f32 %v452, %v475
      %v485 = vadd.f32 %v455, %v480
      %vm486 = vcmask 130048
      %487 = vst.msk [vmem:[%s308] sm:$0xff] %vm486, %v482
      %488 = vst.msk [vmem:[%s308 + $0x8] sm:$0xff] %vm486, %v483
      %489 = vst.msk [vmem:[%s308 + $0x10] sm:$0xff] %vm486, %v484
      %490 = vst.msk [vmem:[%s308 + $0x18] sm:$0xff] %vm486, %v485
      %v491 = vlaneseq
      %v492 = vand.u32 %v491, 127
      %s493 = smul.u32 %s23, 16
      %v494 = vstv %s493
      %v495 = vadd.s32 %v492, %v494
      %vm496 = vcmp.lt.s32.totalorder %v495, 16
      %v497 = vsel %vm496, 1, 0
      %v498 = vcvt.s32.f32 %v497
      %v499 = vmul.f32 %v482, %v498
      %v500 = vmul.f32 %v483, %v498
      %v501 = vmul.f32 %v484, %v498
      %v502 = vmul.f32 %v485, %v498
      %v503 = vld [vmem:[%s6] sm:$0xff]
      %v504 = vld [vmem:[%s6 + $0x8] sm:$0xff]
      %v505 = vld [vmem:[%s6 + $0x10] sm:$0xff]
      %v506 = vld [vmem:[%s6 + $0x18] sm:$0xff]
      %v507 = vsel %vm486, %v499, 0.0
      %508 = vadd.xlane.f32.xlu0 %v507
      %v509 = vpop.xlane.xlu0 %508
      %v510 = vsel %vm486, %v500, 0.0
      %511 = vadd.xlane.f32.xlu0 %v510
      %v512 = vpop.xlane.xlu0 %511
      %v513 = vsel %vm486, %v501, 0.0
      %514 = vadd.xlane.f32.xlu0 %v513
      %v515 = vpop.xlane.xlu0 %514
      %v516 = vsel %vm486, %v502, 0.0
      %517 = vadd.xlane.f32.xlu0 %v516
      %v518 = vpop.xlane.xlu0 %517
      %v519 = vadd.f32 %v503, %v509
      %v520 = vadd.f32 %v504, %v512
      %v521 = vadd.f32 %v505, %v515
      %v522 = vadd.f32 %v506, %v518
      %vm523 = vcmask 7168
      %524 = vst.msk [vmem:[%s6] sm:$0xff] %vm523, %v519
      %525 = vst.msk [vmem:[%s6 + $0x8] sm:$0xff] %vm523, %v520
      %526 = vst.msk [vmem:[%s6 + $0x10] sm:$0xff] %vm523, %v521
      %527 = vst.msk [vmem:[%s6 + $0x18] sm:$0xff] %vm523, %v522
      %v528 = vld [vmem:[%s6] sm:$0xff]
      %v529 = vld [vmem:[%s6 + $0x8] sm:$0xff]
      %v530 = vld [vmem:[%s6 + $0x10] sm:$0xff]
      %v531 = vld [vmem:[%s6 + $0x18] sm:$0xff]
      %v532 = vmul.f32 %v499, %v499
      %v533 = vmul.f32 %v500, %v500
      %v534 = vmul.f32 %v501, %v501
      %v535 = vmul.f32 %v502, %v502
      %v536 = vsel %vm486, %v532, 0.0
      %537 = vadd.xlane.f32.xlu0 %v536
      %v538 = vpop.xlane.xlu0 %537
      %v539 = vsel %vm486, %v533, 0.0
      %540 = vadd.xlane.f32.xlu0 %v539
      %v541 = vpop.xlane.xlu0 %540
      %v542 = vsel %vm486, %v534, 0.0
      %543 = vadd.xlane.f32.xlu0 %v542
      %v544 = vpop.xlane.xlu0 %543
      %v545 = vsel %vm486, %v535, 0.0
      %546 = vadd.xlane.f32.xlu0 %v545
      %v547 = vpop.xlane.xlu0 %546
      %v548 = vadd.f32 %v528, %v538
      %v549 = vadd.f32 %v529, %v541
      %v550 = vadd.f32 %v530, %v544
      %v551 = vadd.f32 %v531, %v547
      %vm552 = vcmask 15368
      %553 = vst.msk [vmem:[%s6] sm:$0xff] %vm552, %v548
      %554 = vst.msk [vmem:[%s6 + $0x8] sm:$0xff] %vm552, %v549
      %555 = vst.msk [vmem:[%s6 + $0x10] sm:$0xff] %vm552, %v550
      %556 = vst.msk [vmem:[%s6 + $0x18] sm:$0xff] %vm552, %v551
      %p557 = scmp.lt.s32.totalorder %s22, 1
      %s558 = scalar_select %p557, %s22, 1
      %p559 = scmp.lt.s32.totalorder %s23, 0
      %s560 = scalar_select %p559, %s23, 0
      %s561 = smul.addr %s558, 4
      %s562 = sadd.s32 %s560, %s561
      %s563 = smul.addr %s562, 8
      %s564 = scalar_lea.vmem %s5, %s563
      // Predicated region
      $region45: #{fp_forward.6} parent=39 // pred_check
        %p565 = pneg %p169
      $region46: #{fp_forward.6} parent=39 // pred_check_branch
        %567 = sbr.rel (%p565) target = $region48
      $region47: #{fp_forward.6} parent=39 // pred_region
        _
      $region48: #{fp_forward.6} parent=39 // pred_fallthru
        _
      // Predicated region
      $region49: #{fp_forward.6} parent=39 // pred_check
        %p568 = pneg %p190
      $region50: #{fp_forward.6} parent=39 // pred_check_branch
        %570 = sbr.rel (%p568) target = $region52
      $region51: #{fp_forward.6} parent=39 // pred_region
        _
      $region52: #{fp_forward.6} parent=39 // pred_fallthru
        _
      // Predicated region
      $region53: #{fp_forward.6} parent=39 // pred_check
        %p571 = pneg %p190
      $region54: #{fp_forward.6} parent=39 // pred_check_branch
        %573 = sbr.rel (%p571) target = $region56
      $region55: #{fp_forward.6} parent=39 // pred_region
        _
      $region56: #{fp_forward.6} parent=39 // pred_fallthru
        _
    $region40: #{fp_forward.6} parent=5 // pred_fallthru
      _
    %p574 = scmp.le.s32.totalorder 2, %s13
    // Predicated region
    $region57: #{fp_forward.6} parent=5 // pred_check
      %p575 = pneg %p574
    $region58: #{fp_forward.6} parent=5 // pred_check_branch
      %577 = sbr.rel (%p575) target = $region60
    $region59: #{fp_forward.6} parent=5 // pred_region
      %s578 = ssub.s32 %s13, 2
      // Predicated region
      $region61: #{fp_forward.6} parent=59 // pred_check
        %p579 = pneg %p175
      $region62: #{fp_forward.6} parent=59 // pred_check_branch
        %581 = sbr.rel (%p579) target = $region64
      $region63: #{fp_forward.6} parent=59 // pred_region
        %p582 = scmp.lt.s32.totalorder %s24, 1
        %s583 = scalar_select %p582, %s24, 1
        %p584 = scmp.lt.s32.totalorder %s25, 0
        %s585 = scalar_select %p584, %s25, 0
        %s586 = smul.addr %s583, 4
        %s587 = sadd.s32 %s585, %s586
        %s588 = smul.addr %s587, 8
        %s589 = scalar_lea.vmem %s5, %s588
      $region64: #{fp_forward.6} parent=59 // pred_fallthru
        _
    $region60: #{fp_forward.6} parent=5 // pred_fallthru
      _
  $region6: #{fp_forward.6} parent=0 // loop_footer
    %s17 = sadd.s32 1, %s13
  $region7: #{fp_forward.6} parent=0 // loop_footer_branch
    %12 = sbr.rel target = $region3
  $region8: #{fp_forward.6} parent=0 // loop_exit
    _

// kernel: fp_forward.8
$region0: #{fp_forward.8}
  #allocation0 [shape = 'u32[]', space=smem, size = 0x4, offset = 0x4, fixed_abs, tag = 'smem constant byte address 0x4 - core index']
  #allocation1 [shape = 'u32[144,128]{1,0:T(1,128)}', space=vmem, size = 0x12000, scoped, tag = 'internal scratch']
  %s0 = inlined_call_operand.vmem [shape: f32[2,32,16], index: 0, kind: input, shape index: {}]
  %s1 = inlined_call_operand.vmem [shape: f32[16,32], index: 1, kind: input, shape index: {}]
  %s2 = inlined_call_operand.vmem [shape: f32[16,1], index: 2, kind: input, shape index: {}]
  %s3 = inlined_call_operand.vmem [shape: f32[2,16,16], index: 3, kind: output, shape index: {0}]
  %s4 = inlined_call_operand.vmem [shape: f32[16,2], index: 4, kind: output, shape index: {1}]
  %5 = xla_tuple %s3, %s4
  %s6 = sld [smem:[#allocation0]]
  $region57: #{fp_forward.8} parent=0
    _
  %s8 = ssub.s32 1, %s6
  %s9 = scalar_select 0, %s8, %s6
  loop: start=0, step=1, limit=4
  $region2: #{fp_forward.8} parent=0 // loop_pre_header
    _
  $region3: #{fp_forward.8} parent=0 // loop_header
    %s11 = sphi 0, %s15
    %p12 = scmp.ge.s32.totalorder %s11, 4
    %s18 = sphi 0, %s30
    %s19 = sphi 0, %s26
    %s20 = sphi 0, %s18
    %s21 = sphi 0, %s19
    %s22 = sphi 0, %s20
    %s23 = sphi 0, %s21
    %s35 = sphi 0, %s37
    %s38 = sphi 0, %s35
    %s39 = sphi 0, %s38
    %s55 = sphi 0, %s39
    %s59 = sphi 0, %s59
    %s61 = sphi 0, %s59
    %s62 = sphi 0, %s61
    %s76 = sphi 0, %s62
    %s80 = sphi 0, %s80
    %s82 = sphi 0, %s80
    %s83 = sphi 0, %s82
    %s97 = sphi 0, %s83
    %s105 = sphi 0, %s107
    %s108 = sphi 0, %s105
    %s109 = sphi 0, %s108
    %s125 = sphi 0, %s109
    %s129 = sphi 0, %s129
    %s131 = sphi 0, %s129
    %s132 = sphi 0, %s131
    %s146 = sphi 0, %s132
  $region4: #{fp_forward.8} parent=0 // loop_header_branch
    %14 = sbr.rel (%p12) target = $region8
  $region5: #{fp_forward.8} parent=0 // loop_body
    %s16 = ssub.s32 %s11, 1
    %s17 = ssub.s32 %s11, 2
    %s24 = sadd.s32 1, %s19
    %p25 = scmp.ge.s32.totalorder %s24, 1
    %s26 = scalar_select %p25, 0, %s24
    %s27 = sadd.s32 1, %s18
    %s28 = scalar_select %p25, %s27, %s18
    %p29 = scmp.ge.s32.totalorder %s28, 2
    %s30 = scalar_select %p29, 0, %s28
    %s31 = ssub.s32 %s18, %s30
    %s32 = ssub.s32 %s19, %s26
    %s33 = sor.u32 %s31, %s32
    %p34 = scmp.eq.s32.totalorder %s33, 0
    %s36 = sadd.s32 %s35, 1
    %s37 = scalar_select %p34, %s35, %s36
    %p40 = pneg %p34
    %p41 = scmp.eq.s32.totalorder %s11, 1
    %p42 = por %p40, %p41
    %p43 = scmp.ne.s32.totalorder %s35, %s38
    %p44 = scmp.eq.s32.totalorder %s11, 0
    %p45 = por %p43, %p44
    %p46 = scmp.ne.s32.totalorder %s35, %s38
    %p47 = scmp.eq.s32.totalorder %s16, 1
    %p48 = por %p46, %p47
    %p49 = scmp.ne.s32.totalorder %s38, %s39
    %p50 = scmp.eq.s32.totalorder %s16, 0
    %p51 = por %p49, %p50
    %p52 = scmp.ne.s32.totalorder %s38, %s39
    %p53 = scmp.eq.s32.totalorder %s17, 1
    %p54 = por %p52, %p53
    %p56 = scmp.ne.s32.totalorder %s39, %s55
    %p57 = scmp.eq.s32.totalorder %s17, 0
    %p58 = por %p56, %p57
    %s60 = sadd.s32 %s59, 1
    %p63 = scmp.eq.s32.totalorder %s11, 1
    %p64 = scmp.ne.s32.totalorder %s59, %s61
    %p65 = scmp.eq.s32.totalorder %s11, 0
    %p66 = por %p64, %p65
    %p67 = scmp.ne.s32.totalorder %s59, %s61
    %p68 = scmp.eq.s32.totalorder %s16, 1
    %p69 = por %p67, %p68
    %p70 = scmp.ne.s32.totalorder %s61, %s62
    %p71 = scmp.eq.s32.totalorder %s16, 0
    %p72 = por %p70, %p71
    %p73 = scmp.ne.s32.totalorder %s61, %s62
    %p74 = scmp.eq.s32.totalorder %s17, 1
    %p75 = por %p73, %p74
    %p77 = scmp.ne.s32.totalorder %s62, %s76
    %p78 = scmp.eq.s32.totalorder %s17, 0
    %p79 = por %p77, %p78
    %s81 = sadd.s32 %s80, 1
    %p84 = scmp.eq.s32.totalorder %s11, 1
    %p85 = scmp.ne.s32.totalorder %s80, %s82
    %p86 = scmp.eq.s32.totalorder %s11, 0
    %p87 = por %p85, %p86
    %p88 = scmp.ne.s32.totalorder %s80, %s82
    %p89 = scmp.eq.s32.totalorder %s16, 1
    %p90 = por %p88, %p89
    %p91 = scmp.ne.s32.totalorder %s82, %s83
    %p92 = scmp.eq.s32.totalorder %s16, 0
    %p93 = por %p91, %p92
    %p94 = scmp.ne.s32.totalorder %s82, %s83
    %p95 = scmp.eq.s32.totalorder %s17, 1
    %p96 = por %p94, %p95
    %p98 = scmp.ne.s32.totalorder %s83, %s97
    %p99 = scmp.eq.s32.totalorder %s17, 0
    %p100 = por %p98, %p99
    %s101 = ssub.s32 %s18, %s30
    %s102 = ssub.s32 %s19, %s26
    %s103 = sor.u32 %s101, %s102
    %p104 = scmp.eq.s32.totalorder %s103, 0
    %s106 = sadd.s32 %s105, 1
    %s107 = scalar_select %p104, %s105, %s106
    %p110 = pneg %p104
    %p111 = scmp.eq.s32.totalorder %s11, 1
    %p112 = por %p110, %p111
    %p113 = scmp.ne.s32.totalorder %s105, %s108
    %p114 = scmp.eq.s32.totalorder %s11, 0
    %p115 = por %p113, %p114
    %p116 = scmp.ne.s32.totalorder %s105, %s108
    %p117 = scmp.eq.s32.totalorder %s16, 1
    %p118 = por %p116, %p117
    %p119 = scmp.ne.s32.totalorder %s108, %s109
    %p120 = scmp.eq.s32.totalorder %s16, 0
    %p121 = por %p119, %p120
    %p122 = scmp.ne.s32.totalorder %s108, %s109
    %p123 = scmp.eq.s32.totalorder %s17, 1
    %p124 = por %p122, %p123
    %p126 = scmp.ne.s32.totalorder %s109, %s125
    %p127 = scmp.eq.s32.totalorder %s17, 0
    %p128 = por %p126, %p127
    %s130 = sadd.s32 %s129, 1
    %p133 = scmp.eq.s32.totalorder %s11, 1
    %p134 = scmp.ne.s32.totalorder %s129, %s131
    %p135 = scmp.eq.s32.totalorder %s11, 0
    %p136 = por %p134, %p135
    %p137 = scmp.ne.s32.totalorder %s129, %s131
    %p138 = scmp.eq.s32.totalorder %s16, 1
    %p139 = por %p137, %p138
    %p140 = scmp.ne.s32.totalorder %s131, %s132
    %p141 = scmp.eq.s32.totalorder %s16, 0
    %p142 = por %p140, %p141
    %p143 = scmp.ne.s32.totalorder %s131, %s132
    %p144 = scmp.eq.s32.totalorder %s17, 1
    %p145 = por %p143, %p144
    %p147 = scmp.ne.s32.totalorder %s132, %s146
    %p148 = scmp.eq.s32.totalorder %s17, 0
    %p149 = por %p147, %p148
    %p150 = scmp.le.s32.totalorder 1, %s11
    %p151 = scmp.lt.s32.totalorder %s11, 3
    %p152 = pnand %p150, %p151
    %p153 = pneg %p152
    // Predicated region
    $region9: #{fp_forward.8} parent=5 // pred_check
      _
    $region10: #{fp_forward.8} parent=5 // pred_check_branch
      %155 = sbr.rel (%p152) target = $region12
    $region11: #{fp_forward.8} parent=5 // pred_region
      %s156 = ssub.s32 %s11, 1
      // Predicated region
      $region13: #{fp_forward.8} parent=11 // pred_check
        %p157 = pneg %p72
      $region14: #{fp_forward.8} parent=11 // pred_check_branch
        %159 = sbr.rel (%p157) target = $region16
      $region15: #{fp_forward.8} parent=11 // pred_region
        _
      $region16: #{fp_forward.8} parent=11 // pred_fallthru
        _
      // Predicated region
      $region17: #{fp_forward.8} parent=11 // pred_check
        %p160 = pneg %p93
      $region18: #{fp_forward.8} parent=11 // pred_check_branch
        %162 = sbr.rel (%p160) target = $region20
      $region19: #{fp_forward.8} parent=11 // pred_region
        _
      $region20: #{fp_forward.8} parent=11 // pred_fallthru
        _
    $region12: #{fp_forward.8} parent=5 // pred_fallthru
      _
    %p163 = scmp.lt.s32.totalorder %s11, 2
    // Predicated region
    $region21: #{fp_forward.8} parent=5 // pred_check
      %p164 = pneg %p163
    $region22: #{fp_forward.8} parent=5 // pred_check_branch
      %166 = sbr.rel (%p164) target = $region24
    $region23: #{fp_forward.8} parent=5 // pred_region
      // Predicated region
      $region25: #{fp_forward.8} parent=23 // pred_check
        %p167 = pneg %p45
      $region26: #{fp_forward.8} parent=23 // pred_check_branch
        %169 = sbr.rel (%p167) target = $region28
      $region27: #{fp_forward.8} parent=23 // pred_region
        %p170 = scmp.lt.s32.totalorder %s18, 1
        %s171 = scalar_select %p170, %s18, 1
        %p172 = scmp.lt.s32.totalorder %s19, 0
        %s173 = scalar_select %p172, %s19, 0
        %s174 = smul.addr %s171, 4
        %s175 = sadd.s32 %s173, %s174
        %s176 = smul.addr %s175, 8
        %s177 = scalar_lea.vmem %s0, %s176
      $region28: #{fp_forward.8} parent=23 // pred_fallthru
        _
    $region24: #{fp_forward.8} parent=5 // pred_fallthru
      _
    %p178 = scmp.le.s32.totalorder 1, %s11
    %p179 = scmp.lt.s32.totalorder %s11, 3
    %p180 = pnand %p178, %p179
    %p181 = pneg %p180
    // Predicated region
    $region29: #{fp_forward.8} parent=5 // pred_check
      _
    $region30: #{fp_forward.8} parent=5 // pred_check_branch
      %183 = sbr.rel (%p180) target = $region32
    $region31: #{fp_forward.8} parent=5 // pred_region
      %s184 = ssub.s32 %s11, 1
      %p185 = scmp.lt.s32.totalorder %s20, 1
      %s186 = scalar_select %p185, %s20, 1
      %p187 = scmp.lt.s32.totalorder %s21, 0
      %s188 = scalar_select %p187, %s21, 0
      %s189 = smul.addr %s186, 4
      %s190 = sadd.s32 %s188, %s189
      %s191 = smul.addr %s190, 8
      %s192 = scalar_lea.vmem %s0, %s191
      %p193 = pneg %p51
      %p194 = pneg %p48
      %p195 = pneg %p72
      %p196 = pneg %p69
      %p197 = pneg %p93
      %p198 = pneg %p90
      %p199 = pneg %p121
      %p200 = pneg %p118
      %p201 = scmp.lt.s32.totalorder %s20, 1
      %s202 = scalar_select %p201, %s20, 1
      %p203 = scmp.lt.s32.totalorder %s21, 0
      %s204 = scalar_select %p203, %s21, 0
      %s205 = smul.addr %s202, 2
      %s206 = sadd.s32 %s204, %s205
      %s207 = smul.addr %s206, 8
      %s208 = scalar_lea.vmem %s3, %s207
      %p209 = pneg %p142
      %p210 = pneg %p139
      %p211 = scmp.lt.s32.totalorder %s20, 1
      %s212 = scalar_select %p211, %s20, 1
      %p213 = scmp.lt.s32.totalorder %s21, 0
      %s214 = scalar_select %p213, %s21, 0
      %s215 = smul.addr %s212, 4
      %s216 = sadd.s32 %s214, %s215
      %s217 = smul.addr %s216, 8
      %s218 = scalar_lea.vmem %s0, %s217
      %p219 = scmp.lt.s32.totalorder %s20, 1
      %s220 = scalar_select %p219, %s20, 1
      %p221 = scmp.lt.s32.totalorder %s21, 0
      %s222 = scalar_select %p221, %s21, 0
      %s223 = smul.addr %s220, 2
      %s224 = sadd.s32 %s222, %s223
      %s225 = smul.addr %s224, 8
      %s226 = scalar_lea.vmem %s3, %s225
      %p228 = scmp.eq.s32.totalorder %s20, 0
      %p229 = scmp.eq.s32.totalorder %s21, 0
      %p230 = pnand %p228, %p229
      %p231 = pneg %p230
      // Predicated region
      $region33: #{fp_forward.8} parent=31 // pred_check
        _
      $region34: #{fp_forward.8} parent=31 // pred_check_branch
        %233 = sbr.rel (%p230) target = $region36
      $region35: #{fp_forward.8} parent=31 // pred_region
        %vm234 = vcmask 15360
        %235 = vst.msk [vmem:[%s4] sm:$0xff] %vm234, 0.0
        %236 = vst.msk [vmem:[%s4 + $0x8] sm:$0xff] %vm234, 0.0
      $region36: #{fp_forward.8} parent=31 // pred_fallthru
        _
      %v237 = vld [vmem:[%s218] sm:$0xff]
      %v238 = vld [vmem:[%s218 + $0x8] sm:$0xff]
      %v239 = vld [vmem:[%s218 + $0x10] sm:$0xff]
      %v240 = vld [vmem:[%s218 + $0x18] sm:$0xff]
      %v241 = vld [vmem:[%s1] sm:$0xff]
      %v242 = vld [vmem:[%s1 + $0x8] sm:$0xff]
      %v243 = vpack.c.bf16 %v242, %v241
      %v244 = vpack.c.bf16 %v238, %v237
      %v245 = vpack.c.bf16 %v240, %v239
      %v246 = vld [vmem:[%s2] sm:$0xff]
      %v247 = vld [vmem:[%s2 + $0x8] sm:$0xff]
      %249 = vset.pattern.permute.xlu0 0
      %250 = vperm.xlu0 %249, %v246
      %v251 = vpop.permute.xlu0 %250
      %254 = vset.pattern.permute.xlu0 0
      %255 = vperm.xlu0 %254, %v247
      %v256 = vpop.permute.xlu0 %255
      %vm258 = vcmask 261120
      %v260 = vsel %vm258, %v243, 0
      %262 = vmatprep.subr.bf16.mxu0 0
      %263 = vmatpush1.bf16.msra.mxu0 0
      %264 = vmatprep.subr.bf16.mxu0 0
      %265 = vmatpush1.bf16.msra.mxu0 0
      %266 = vmatprep.subr.bf16.mxu0 0
      %267 = vmatpush1.bf16.msra.mxu0 0
      %268 = vmatprep.subr.bf16.mxu0 0
      %269 = vmatpush1.bf16.msra.mxu0 0
      %270 = vmatprep.subr.bf16.mxu0 0
      %271 = vmatpush1.bf16.msra.mxu0 0
      %272 = vmatprep.subr.bf16.mxu0 0
      %273 = vmatpush1.bf16.msra.mxu0 0
      %274 = vmatprep.subr.bf16.mxu0 0
      %275 = vmatpush1.bf16.msra.mxu0 %v245
      %276 = vmatprep.subr.bf16.mxu0 0
      %277 = vmatpush1.bf16.msra.mxu0 %v244
      %278 = vmatprep.subr.bf16.mxu0 0
      %279 = vmatpush2.bf16.msra.mxu0 0
      %280 = vmatprep.subr.bf16.mxu0 0
      %281 = vmatpush2.bf16.msra.mxu0 0
      %282 = vmatprep.subr.bf16.mxu0 0
      %283 = vmatpush2.bf16.msra.mxu0 0
      %284 = vmatprep.subr.bf16.mxu0 0
      %285 = vmatpush2.bf16.msra.mxu0 0
      %286 = vmatprep.subr.bf16.mxu0 0
      %287 = vmatpush2.bf16.msra.mxu0 0
      %288 = vmatprep.subr.bf16.mxu0 0
      %289 = vmatpush2.bf16.msra.mxu0 0
      %290 = vmatprep.subr.bf16.mxu0 0
      %291 = vmatpush2.bf16.msra.mxu0 0
      %292 = vmatprep.subr.bf16.mxu0 0
      %293 = vmatpush2.bf16.msra.mxu0 0
      %294 = vmatprep.mubr.bf16.mxu0 0
      %295 = vmatmul.mubr.bf16.gmra.mxu0 %v260
      %v296 = vpop.f32.mrf.mxu0
      %v297 = vadd.f32 %v251, %v296
      %v298 = vpop.f32.mrf.mxu0
      %v299 = vpop.f32.mrf.mxu0
      %v300 = vadd.f32 %v256, %v299
      %v301 = vpop.f32.mrf.mxu0
      %302 = vdwg.mxu0
      %vm303 = vcmask 130048
      %304 = vst.msk [vmem:[%s226] sm:$0xff] %vm303, %v297
      %305 = vst.msk [vmem:[%s226 + $0x8] sm:$0xff] %vm303, %v300
      %v306 = vlaneseq
      %v307 = vand.u32 %v306, 127
      %s308 = smul.u32 %s21, 16
      %v309 = vstv %s308
      %v310 = vadd.s32 %v307, %v309
      %vm311 = vcmp.lt.s32.totalorder %v310, 16
      %v312 = vsel %vm311, 1, 0
      %v313 = vcvt.s32.f32 %v312
      %v314 = vmul.f32 %v297, %v313
      %v315 = vmul.f32 %v300, %v313
      %v316 = vld [vmem:[%s4] sm:$0xff]
      %v317 = vld [vmem:[%s4 + $0x8] sm:$0xff]
      %v318 = vsel %vm303, %v314, 0.0
      %319 = vadd.xlane.f32.xlu0 %v318
      %v320 = vpop.xlane.xlu0 %319
      %v321 = vsel %vm303, %v315, 0.0
      %322 = vadd.xlane.f32.xlu0 %v321
      %v323 = vpop.xlane.xlu0 %322
      %v324 = vadd.f32 %v316, %v320
      %v325 = vadd.f32 %v317, %v323
      %vm326 = vcmask 7168
      %327 = vst.msk [vmem:[%s4] sm:$0xff] %vm326, %v324
      %328 = vst.msk [vmem:[%s4 + $0x8] sm:$0xff] %vm326, %v325
      %v329 = vld [vmem:[%s4] sm:$0xff]
      %v330 = vld [vmem:[%s4 + $0x8] sm:$0xff]
      %v331 = vmul.f32 %v314, %v314
      %v332 = vmul.f32 %v315, %v315
      %v333 = vsel %vm303, %v331, 0.0
      %334 = vadd.xlane.f32.xlu0 %v333
      %v335 = vpop.xlane.xlu0 %334
      %v336 = vsel %vm303, %v332, 0.0
      %337 = vadd.xlane.f32.xlu0 %v336
      %v338 = vpop.xlane.xlu0 %337
      %v339 = vadd.f32 %v329, %v335
      %v340 = vadd.f32 %v330, %v338
      %vm341 = vcmask 15368
      %342 = vst.msk [vmem:[%s4] sm:$0xff] %vm341, %v339
      %343 = vst.msk [vmem:[%s4 + $0x8] sm:$0xff] %vm341, %v340
      %p344 = scmp.lt.s32.totalorder %s20, 1
      %s345 = scalar_select %p344, %s20, 1
      %p346 = scmp.lt.s32.totalorder %s21, 0
      %s347 = scalar_select %p346, %s21, 0
      %s348 = smul.addr %s345, 2
      %s349 = sadd.s32 %s347, %s348
      %s350 = smul.addr %s349, 8
      %s351 = scalar_lea.vmem %s3, %s350
      // Predicated region
      $region37: #{fp_forward.8} parent=31 // pred_check
        %p352 = pneg %p118
      $region38: #{fp_forward.8} parent=31 // pred_check_branch
        %354 = sbr.rel (%p352) target = $region40
      $region39: #{fp_forward.8} parent=31 // pred_region
        _
      $region40: #{fp_forward.8} parent=31 // pred_fallthru
        _
      // Predicated region
      $region41: #{fp_forward.8} parent=31 // pred_check
        %p355 = pneg %p139
      $region42: #{fp_forward.8} parent=31 // pred_check_branch
        %357 = sbr.rel (%p355) target = $region44
      $region43: #{fp_forward.8} parent=31 // pred_region
        _
      $region44: #{fp_forward.8} parent=31 // pred_fallthru
        _
      // Predicated region
      $region45: #{fp_forward.8} parent=31 // pred_check
        %p358 = pneg %p139
      $region46: #{fp_forward.8} parent=31 // pred_check_branch
        %360 = sbr.rel (%p358) target = $region48
      $region47: #{fp_forward.8} parent=31 // pred_region
        _
      $region48: #{fp_forward.8} parent=31 // pred_fallthru
        _
    $region32: #{fp_forward.8} parent=5 // pred_fallthru
      _
    %p361 = scmp.le.s32.totalorder 2, %s11
    // Predicated region
    $region49: #{fp_forward.8} parent=5 // pred_check
      %p362 = pneg %p361
    $region50: #{fp_forward.8} parent=5 // pred_check_branch
      %364 = sbr.rel (%p362) target = $region52
    $region51: #{fp_forward.8} parent=5 // pred_region
      %s365 = ssub.s32 %s11, 2
      // Predicated region
      $region53: #{fp_forward.8} parent=51 // pred_check
        %p366 = pneg %p124
      $region54: #{fp_forward.8} parent=51 // pred_check_branch
        %368 = sbr.rel (%p366) target = $region56
      $region55: #{fp_forward.8} parent=51 // pred_region
        %p369 = scmp.lt.s32.totalorder %s22, 1
        %s370 = scalar_select %p369, %s22, 1
        %p371 = scmp.lt.s32.totalorder %s23, 0
        %s372 = scalar_select %p371, %s23, 0
        %s373 = smul.addr %s370, 2
        %s374 = sadd.s32 %s372, %s373
        %s375 = smul.addr %s374, 8
        %s376 = scalar_lea.vmem %s3, %s375
      $region56: #{fp_forward.8} parent=51 // pred_fallthru
        _
    $region52: #{fp_forward.8} parent=5 // pred_fallthru
      _
  $region6: #{fp_forward.8} parent=0 // loop_footer
    %s15 = sadd.s32 1, %s11
  $region7: #{fp_forward.8} parent=0 // loop_footer_branch
    %10 = sbr.rel target = $region3
  $region8: #{fp_forward.8} parent=0 // loop_exit
    _

// kernel: fp_forward.9
$region0: #{fp_forward.9}
  #allocation0 [shape = 'u32[]', space=smem, size = 0x4, offset = 0x4, fixed_abs, tag = 'smem constant byte address 0x4 - core index']
  #allocation1 [shape = 'u32[144,128]{1,0:T(1,128)}', space=vmem, size = 0x12000, scoped, tag = 'internal scratch']
  %s0 = inlined_call_operand.vmem [shape: f32[2,16,16], index: 0, kind: input, shape index: {}]
  %s1 = inlined_call_operand.vmem [shape: f32[16,1], index: 1, kind: input, shape index: {}]
  %s2 = inlined_call_operand.vmem [shape: f32[16,1], index: 2, kind: input, shape index: {}]
  %s3 = inlined_call_operand.hbm [shape: f32[2,16,16], index: 3, kind: output, shape index: {}]
  %s4 = sld [smem:[#allocation0]]
  $region45: #{fp_forward.9} parent=0
    _
  %s6 = ssub.s32 1, %s4
  %s7 = scalar_select 0, %s6, %s4
  $region1: #{fp_forward.9} parent=0
    #allocation2 [shape = 'u8[16384]{0}', space=vmem, size = 0x4000, scoped, tag = 'output window, operand 0']
    #allocation3 [shape = 's32[2]{0}', space=sflag, size = 0x8, scoped, tag = 'scoped memory for fp_forward.9']
    %8 = vsyncpa [#allocation3], 0
    %s9 = scalar_lea.sflag [#allocation3], 1
    %10 = vsyncpa %s9, 0
    loop: start=0, step=1, limit=4
    $region2: #{fp_forward.9} parent=1 // loop_pre_header
      _
    $region3: #{fp_forward.9} parent=1 // loop_header
      %s12 = sphi 0, %s16
      %p13 = scmp.ge.s32.totalorder %s12, 4
      %s19 = sphi 0, %s31
      %s20 = sphi 0, %s27
      %s21 = sphi 0, %s19
      %s22 = sphi 0, %s20
      %s23 = sphi 0, %s21
      %s24 = sphi 0, %s22
      %s36 = sphi 0, %s38
      %s39 = sphi 0, %s36
      %s40 = sphi 0, %s39
      %s56 = sphi 0, %s40
      %s60 = sphi 0, %s60
      %s62 = sphi 0, %s60
      %s63 = sphi 0, %s62
      %s77 = sphi 0, %s63
      %s81 = sphi 0, %s81
      %s83 = sphi 0, %s81
      %s84 = sphi 0, %s83
      %s98 = sphi 0, %s84
      %s106 = sphi 0, %s108
      %s109 = sphi 0, %s106
      %s110 = sphi 0, %s109
      %s126 = sphi 0, %s110
    $region4: #{fp_forward.9} parent=1 // loop_header_branch
      %15 = sbr.rel (%p13) target = $region8
    $region5: #{fp_forward.9} parent=1 // loop_body
      %s17 = ssub.s32 %s12, 1
      %s18 = ssub.s32 %s12, 2
      %s25 = sadd.s32 1, %s20
      %p26 = scmp.ge.s32.totalorder %s25, 1
      %s27 = scalar_select %p26, 0, %s25
      %s28 = sadd.s32 1, %s19
      %s29 = scalar_select %p26, %s28, %s19
      %p30 = scmp.ge.s32.totalorder %s29, 2
      %s31 = scalar_select %p30, 0, %s29
      %s32 = ssub.s32 %s19, %s31
      %s33 = ssub.s32 %s20, %s27
      %s34 = sor.u32 %s32, %s33
      %p35 = scmp.eq.s32.totalorder %s34, 0
      %s37 = sadd.s32 %s36, 1
      %s38 = scalar_select %p35, %s36, %s37
      %p41 = pneg %p35
      %p42 = scmp.eq.s32.totalorder %s12, 1
      %p43 = por %p41, %p42
      %p44 = scmp.ne.s32.totalorder %s36, %s39
      %p45 = scmp.eq.s32.totalorder %s12, 0
      %p46 = por %p44, %p45
      %p47 = scmp.ne.s32.totalorder %s36, %s39
      %p48 = scmp.eq.s32.totalorder %s17, 1
      %p49 = por %p47, %p48
      %p50 = scmp.ne.s32.totalorder %s39, %s40
      %p51 = scmp.eq.s32.totalorder %s17, 0
      %p52 = por %p50, %p51
      %p53 = scmp.ne.s32.totalorder %s39, %s40
      %p54 = scmp.eq.s32.totalorder %s18, 1
      %p55 = por %p53, %p54
      %p57 = scmp.ne.s32.totalorder %s40, %s56
      %p58 = scmp.eq.s32.totalorder %s18, 0
      %p59 = por %p57, %p58
      %s61 = sadd.s32 %s60, 1
      %p64 = scmp.eq.s32.totalorder %s12, 1
      %p65 = scmp.ne.s32.totalorder %s60, %s62
      %p66 = scmp.eq.s32.totalorder %s12, 0
      %p67 = por %p65, %p66
      %p68 = scmp.ne.s32.totalorder %s60, %s62
      %p69 = scmp.eq.s32.totalorder %s17, 1
      %p70 = por %p68, %p69
      %p71 = scmp.ne.s32.totalorder %s62, %s63
      %p72 = scmp.eq.s32.totalorder %s17, 0
      %p73 = por %p71, %p72
      %p74 = scmp.ne.s32.totalorder %s62, %s63
      %p75 = scmp.eq.s32.totalorder %s18, 1
      %p76 = por %p74, %p75
      %p78 = scmp.ne.s32.totalorder %s63, %s77
      %p79 = scmp.eq.s32.totalorder %s18, 0
      %p80 = por %p78, %p79
      %s82 = sadd.s32 %s81, 1
      %p85 = scmp.eq.s32.totalorder %s12, 1
      %p86 = scmp.ne.s32.totalorder %s81, %s83
      %p87 = scmp.eq.s32.totalorder %s12, 0
      %p88 = por %p86, %p87
      %p89 = scmp.ne.s32.totalorder %s81, %s83
      %p90 = scmp.eq.s32.totalorder %s17, 1
      %p91 = por %p89, %p90
      %p92 = scmp.ne.s32.totalorder %s83, %s84
      %p93 = scmp.eq.s32.totalorder %s17, 0
      %p94 = por %p92, %p93
      %p95 = scmp.ne.s32.totalorder %s83, %s84
      %p96 = scmp.eq.s32.totalorder %s18, 1
      %p97 = por %p95, %p96
      %p99 = scmp.ne.s32.totalorder %s84, %s98
      %p100 = scmp.eq.s32.totalorder %s18, 0
      %p101 = por %p99, %p100
      %s102 = ssub.s32 %s19, %s31
      %s103 = ssub.s32 %s20, %s27
      %s104 = sor.u32 %s102, %s103
      %p105 = scmp.eq.s32.totalorder %s104, 0
      %s107 = sadd.s32 %s106, 1
      %s108 = scalar_select %p105, %s106, %s107
      %p111 = pneg %p105
      %p112 = scmp.eq.s32.totalorder %s12, 1
      %p113 = por %p111, %p112
      %p114 = scmp.ne.s32.totalorder %s106, %s109
      %p115 = scmp.eq.s32.totalorder %s12, 0
      %p116 = por %p114, %p115
      %p117 = scmp.ne.s32.totalorder %s106, %s109
      %p118 = scmp.eq.s32.totalorder %s17, 1
      %p119 = por %p117, %p118
      %p120 = scmp.ne.s32.totalorder %s109, %s110
      %p121 = scmp.eq.s32.totalorder %s17, 0
      %p122 = por %p120, %p121
      %p123 = scmp.ne.s32.totalorder %s109, %s110
      %p124 = scmp.eq.s32.totalorder %s18, 1
      %p125 = por %p123, %p124
      %p127 = scmp.ne.s32.totalorder %s110, %s126
      %p128 = scmp.eq.s32.totalorder %s18, 0
      %p129 = por %p127, %p128
      %p130 = scmp.le.s32.totalorder 1, %s12
      %p131 = scmp.lt.s32.totalorder %s12, 3
      %p132 = pnand %p130, %p131
      %p133 = pneg %p132
      // Predicated region
      $region9: #{fp_forward.9} parent=5 // pred_check
        _
      $region10: #{fp_forward.9} parent=5 // pred_check_branch
        %135 = sbr.rel (%p132) target = $region12
      $region11: #{fp_forward.9} parent=5 // pred_region
        %s136 = ssub.s32 %s12, 1
        // Predicated region
        $region13: #{fp_forward.9} parent=11 // pred_check
          %p137 = pneg %p73
        $region14: #{fp_forward.9} parent=11 // pred_check_branch
          %139 = sbr.rel (%p137) target = $region16
        $region15: #{fp_forward.9} parent=11 // pred_region
          _
        $region16: #{fp_forward.9} parent=11 // pred_fallthru
          _
        // Predicated region
        $region17: #{fp_forward.9} parent=11 // pred_check
          %p140 = pneg %p94
        $region18: #{fp_forward.9} parent=11 // pred_check_branch
          %142 = sbr.rel (%p140) target = $region20
        $region19: #{fp_forward.9} parent=11 // pred_region
          _
        $region20: #{fp_forward.9} parent=11 // pred_fallthru
          _
      $region12: #{fp_forward.9} parent=5 // pred_fallthru
        _
      %p143 = scmp.lt.s32.totalorder %s12, 2
      // Predicated region
      $region21: #{fp_forward.9} parent=5 // pred_check
        %p144 = pneg %p143
      $region22: #{fp_forward.9} parent=5 // pred_check_branch
        %146 = sbr.rel (%p144) target = $region24
      $region23: #{fp_forward.9} parent=5 // pred_region
        // Predicated region
        $region25: #{fp_forward.9} parent=23 // pred_check
          %p147 = pneg %p46
        $region26: #{fp_forward.9} parent=23 // pred_check_branch
          %149 = sbr.rel (%p147) target = $region28
        $region27: #{fp_forward.9} parent=23 // pred_region
          %p150 = scmp.lt.s32.totalorder %s19, 1
          %s151 = scalar_select %p150, %s19, 1
          %p152 = scmp.lt.s32.totalorder %s20, 0
          %s153 = scalar_select %p152, %s20, 0
          %s154 = smul.addr %s151, 2
          %s155 = sadd.s32 %s153, %s154
          %s156 = smul.addr %s155, 8
          %s157 = scalar_lea.vmem %s0, %s156
        $region28: #{fp_forward.9} parent=23 // pred_fallthru
          _
      $region24: #{fp_forward.9} parent=5 // pred_fallthru
        _
      %p158 = scmp.le.s32.totalorder 1, %s12
      %p159 = scmp.lt.s32.totalorder %s12, 3
      %p160 = pnand %p158, %p159
      %p161 = pneg %p160
      // Predicated region
      $region29: #{fp_forward.9} parent=5 // pred_check
        _
      $region30: #{fp_forward.9} parent=5 // pred_check_branch
        %163 = sbr.rel (%p160) target = $region32
      $region31: #{fp_forward.9} parent=5 // pred_region
        %s164 = ssub.s32 %s12, 1
        %p165 = scmp.lt.s32.totalorder %s21, 1
        %s166 = scalar_select %p165, %s21, 1
        %p167 = scmp.lt.s32.totalorder %s22, 0
        %s168 = scalar_select %p167, %s22, 0
        %s169 = smul.addr %s166, 2
        %s170 = sadd.s32 %s168, %s169
        %s171 = smul.addr %s170, 8
        %s172 = scalar_lea.vmem %s0, %s171
        %p173 = pneg %p52
        %p174 = pneg %p49
        %p175 = pneg %p73
        %p176 = pneg %p70
        %p177 = pneg %p94
        %p178 = pneg %p91
        %p179 = pneg %p122
        %p180 = pneg %p119
        %s181 = sand.u32 %s109, 1
        %s182 = scalar_lea.sflag [#allocation3], %s181
        %s183 = sand.u32 %s109, 1
        %s184 = smul.addr %s183, 16
        %s185 = scalar_lea.vmem [#allocation2], %s184
        %p186 = scmp.lt.s32.totalorder %s21, 1
        %s187 = scalar_select %p186, %s21, 1
        %p188 = scmp.lt.s32.totalorder %s22, 0
        %s189 = scalar_select %p188, %s22, 0
        %s190 = smul.addr %s187, 2
        %s191 = sadd.s32 %s189, %s190
        %s192 = smul.addr %s191, 8
        %s193 = scalar_lea.vmem %s0, %s192
        %v194 = vld [vmem:[%s193] sm:$0xff]
        %v195 = vld [vmem:[%s193 + $0x8] sm:$0xff]
        %v196 = vld [vmem:[%s1] sm:$0xff]
        %v197 = vld [vmem:[%s1 + $0x8] sm:$0xff]
        %199 = vset.pattern.permute.xlu0 0
        %200 = vperm.xlu0 %199, %v196
        %v201 = vpop.permute.xlu0 %200
        %204 = vset.pattern.permute.xlu0 0
        %205 = vperm.xlu0 %204, %v197
        %v206 = vpop.permute.xlu0 %205
        %v208 = vmul.f32 %v194, %v201
        %v209 = vmul.f32 %v195, %v206
        %v210 = vld [vmem:[%s2] sm:$0xff]
        %v211 = vld [vmem:[%s2 + $0x8] sm:$0xff]
        %213 = vset.pattern.permute.xlu0 0
        %214 = vperm.xlu0 %213, %v210
        %v215 = vpop.permute.xlu0 %214
        %218 = vset.pattern.permute.xlu0 0
        %219 = vperm.xlu0 %218, %v211
        %v220 = vpop.permute.xlu0 %219
        %v222 = vadd.f32 %v208, %v215
        %v223 = vadd.f32 %v209, %v220
        %v224 = vmax.f32 %v222, 0.0
        %v225 = vmax.f32 %v223, 0.0
        %vm226 = vcmask 130048
        %227 = vst.msk [vmem:[%s185] sm:$0xff] %vm226, %v224
        %228 = vst.msk [vmem:[%s185 + $0x8] sm:$0xff] %vm226, %v225
        %s229 = sand.u32 %s109, 1
        %s230 = scalar_lea.sflag [#allocation3], %s229
        %s231 = sand.u32 %s109, 1
        %s232 = smul.addr %s231, 16
        %s233 = scalar_lea.vmem [#allocation2], %s232
        // Predicated region
        $region33: #{fp_forward.9} parent=31 // pred_check
          %p234 = pneg %p119
        $region34: #{fp_forward.9} parent=31 // pred_check_branch
          %236 = sbr.rel (%p234) target = $region36
        $region35: #{fp_forward.9} parent=31 // pred_region
          %s238 = ssub.s32 256, 256
          %239 = vsyncadd %s230, %s238
          %s240 = smul.addr %s21, 2
          %s241 = sadd.s32 %s22, %s240
          %s242 = smul.addr %s241, 128
          %s243 = scalar_lea.hbm %s3, %s242
          %s244 = sshll.u32 %s233, 4
          %s245 = int_to_ptr.vmem [resolvable:$true] %s244
          %250 = dma.vmem_to_hbm [thread:$0]  %s245, 256, %s243, %s230, 128, 128, 8
        $region36: #{fp_forward.9} parent=31 // pred_fallthru
          _
      $region32: #{fp_forward.9} parent=5 // pred_fallthru
        _
      %p251 = scmp.le.s32.totalorder 2, %s12
      // Predicated region
      $region37: #{fp_forward.9} parent=5 // pred_check
        %p252 = pneg %p251
      $region38: #{fp_forward.9} parent=5 // pred_check_branch
        %254 = sbr.rel (%p252) target = $region40
      $region39: #{fp_forward.9} parent=5 // pred_region
        %s255 = ssub.s32 %s12, 2
        // Predicated region
        $region41: #{fp_forward.9} parent=39 // pred_check
          %p256 = pneg %p125
        $region42: #{fp_forward.9} parent=39 // pred_check_branch
          %258 = sbr.rel (%p256) target = $region44
        $region43: #{fp_forward.9} parent=39 // pred_region
          %s259 = sand.u32 %s110, 1
          %s260 = scalar_lea.sflag [#allocation3], %s259
          %s261 = sand.u32 %s110, 1
          %s262 = smul.addr %s261, 16
          %s263 = scalar_lea.vmem [#allocation2], %s262
          %264 = dma.done %s260, 256
        $region44: #{fp_forward.9} parent=39 // pred_fallthru
          _
      $region40: #{fp_forward.9} parent=5 // pred_fallthru
        _
    $region6: #{fp_forward.9} parent=1 // loop_footer
      %s16 = sadd.s32 1, %s12
    $region7: #{fp_forward.9} parent=1 // loop_footer_branch
      %11 = sbr.rel target = $region3
    $region8: #{fp_forward.9} parent=1 // loop_exit
      _
    %265 = vsyncpa [#allocation3], 1
    %s266 = scalar_lea.sflag [#allocation3], 1
    %267 = vsyncpa %s266, 1

</llo_original>
